<compile_context>
chip_gen: v7x
topology: tpu7x:2x2x1
jax: 0.10.0
libtpu: 0.0.40
codegen_flags: <defaults>
</compile_context>

<pallas_src>
import math

import jax
import jax.numpy as jnp
from jax.experimental import pallas as pl
from jax.experimental.pallas import tpu as pltpu

AMINO_ACIDS = list('ACDEFGHIKLMNPQRSTVWY-')
VOCAB_SIZE = len(AMINO_ACIDS) + 1  # +1 for pad token 0


# ----------------------------------------------------------------------------
# Pallas kernel: all encoder layers, one batch tile per "parallel" grid step,
# one layer per "arbitrary" grid step.  Activation carried in VMEM scratch.
# ----------------------------------------------------------------------------
def _make_encoder_kernel(H, d_k, d_v, with_attn):
    def kernel(*refs):
        if with_attn:
            (x_ref, bias_ref, wq_ref, wk_ref, wv_ref, wo_ref,
             g1_ref, b1_ref, w1_ref, w2_ref, g2_ref, b2_ref,
             out_ref, attn_ref, act_ref) = refs
        else:
            (x_ref, bias_ref, wq_ref, wk_ref, wv_ref, wo_ref,
             g1_ref, b1_ref, w1_ref, w2_ref, g2_ref, b2_ref,
             out_ref, act_ref) = refs
            attn_ref = None

        Bt, S, D = x_ref.shape
        T = Bt * S                      # rows presented to the MXU
        cdt = wq_ref.dtype              # matmul operand dtype (f32 / bf16)

        # First layer for this batch tile: load the (emb + pos-enc) activations.
        @pl.when(pl.program_id(1) == 0)
        def _():
            act_ref[...] = x_ref[...].reshape(T, D)

        x2 = act_ref[...]               # (T, D) f32, VMEM-resident across layers
        xc = x2.astype(cdt)
        bias = bias_ref[...]            # (Bt, 1, S): 0 / -1e9 additive pad bias

        # ---- fused full-width QKV projections (scale folded into W_Q) -------
        q = jnp.dot(xc, wq_ref[0], preferred_element_type=jnp.float32)  # (T,H*dk)
        k = jnp.dot(xc, wk_ref[0], preferred_element_type=jnp.float32)  # (T,H*dk)
        v = jnp.dot(xc, wv_ref[0], preferred_element_type=jnp.float32)  # (T,H*dv)

        # ---- per-head scores / softmax / PV (contraction depth is d_k) ------
        ctx_parts = []
        for h in range(H):              # small static loop; projections already fused
            qh = q[:, h * d_k:(h + 1) * d_k].reshape(Bt, S, d_k).astype(cdt)
            kh = k[:, h * d_k:(h + 1) * d_k].reshape(Bt, S, d_k).astype(cdt)
            vh = v[:, h * d_v:(h + 1) * d_v].reshape(Bt, S, d_v).astype(cdt)

            s = jnp.einsum('bqd,bkd->bqk', qh, kh,
                           preferred_element_type=jnp.float32) + bias   # (Bt,S,S)
            m = jnp.max(s, axis=-1, keepdims=True)
            e = jnp.exp(s - m)
            inv = 1.0 / jnp.sum(e, axis=-1, keepdims=True)              # (Bt,S,1)
            attn = e * inv                                              # softmax
            if attn_ref is not None:
                attn_ref[0, h] = attn                                   # (Bt,S,S)

            ctx_h = jnp.einsum('bqk,bkd->bqd', attn.astype(cdt), vh,
                               preferred_element_type=jnp.float32)      # (Bt,S,dv)
            ctx_parts.append(ctx_h.reshape(T, d_v))

        # ---- single deep output projection + residual + LayerNorm -----------
        ctx2 = jnp.concatenate(ctx_parts, axis=-1)                      # (T, H*dv)
        proj = jnp.dot(ctx2.astype(cdt), wo_ref[0],
                       preferred_element_type=jnp.float32)              # (T, D)
        y = proj + x2
        mu = jnp.mean(y, axis=-1, keepdims=True)
        var = jnp.mean((y - mu) ** 2, axis=-1, keepdims=True)
        y = (y - mu) * jax.lax.rsqrt(var + 1e-5) * g1_ref[0] + b1_ref[0]

        # ---- position-wise feed-forward + residual + LayerNorm --------------
        h1 = jnp.maximum(
            jnp.dot(y.astype(cdt), w1_ref[0],
                    preferred_element_type=jnp.float32), 0.0)
        h2 = jnp.dot(h1.astype(cdt), w2_ref[0],
                     preferred_element_type=jnp.float32)
        z = h2 + y
        mu2 = jnp.mean(z, axis=-1, keepdims=True)
        var2 = jnp.mean((z - mu2) ** 2, axis=-1, keepdims=True)
        zn = (z - mu2) * jax.lax.rsqrt(var2 + 1e-5) * g2_ref[0] + b2_ref[0]

        last = pl.num_programs(1) - 1

        @pl.when(pl.program_id(1) != last)
        def _():
            act_ref[...] = zn                        # carry to next layer (VMEM)

        @pl.when(pl.program_id(1) == last)
        def _():
            out_ref[...] = zn.reshape(Bt, S, D)      # only the final layer stores

    return kernel


def _pick_batch_tile(B, S, target_rows=256):
    """Batch tile so Bt*S targets >=256 MXU rows, with >=2 tiles for 2-TC v7x."""
    bt = min(B, max(1, -(-target_rows // S)))
    while B % bt:
        bt -= 1
    if B >= 2 and B // bt < 2:          # keep the "parallel" axis shardable
        bt = max(1, B // 2)             # across the 2 TensorCores on v7x
        while B % bt:
            bt -= 1
    return bt


def _vmem_limit_bytes():
    """Scoped-VMEM ceiling per generation (~85% of physical, 64 MiB fallback)."""
    try:
        cap = int(getattr(pltpu.get_tpu_info(), "vmem_capacity_bytes",
                          64 * 1024 * 1024))
    except Exception:
        cap = 64 * 1024 * 1024
    return max(32 * 1024 * 1024, int(cap * 0.85))


def encoder_layers_pallas(x, bias, packed, *, n_heads, d_k, d_v,
                          batch_tile=None, with_attn=True):
    """x: (B,S,D) f32 activations, bias: (B,1,S) additive pad bias.

    Returns (out (B,S,D), attn (L,H,B,S,S) or None)."""
    B, S, D = x.shape
    L = packed['wq'].shape[0]
    d_ff = packed['w1'].shape[2]

    Bt = batch_tile if batch_tile is not None else _pick_batch_tile(B, S)
    assert B % Bt == 0
    nb = B // Bt

    def layer_spec(shape):
        # Per-layer weight block: leading layer axis indexed by the (inner,
        # "arbitrary") layer grid dim -> next layer's weights are prefetched
        # while the current layer computes.
        # TODO(synk): on v5e/v6e with small models, whole-stack resident
        # weights (unblocked specs) would cut weight HBM traffic by nb×.
        return pl.BlockSpec((1,) + shape, lambda b, l: (l,) + (0,) * len(shape))

    out_shapes = [jax.ShapeDtypeStruct((B, S, D), jnp.float32)]
    out_specs = [pl.BlockSpec((Bt, S, D), lambda b, l: (b, 0, 0))]
    if with_attn:
        out_shapes.append(jax.ShapeDtypeStruct((L, n_heads, B, S, S),
                                               jnp.float32))
        out_specs.append(pl.BlockSpec((1, n_heads, Bt, S, S),
                                      lambda b, l: (l, 0, b, 0, 0)))

    kernel = _make_encoder_kernel(n_heads, d_k, d_v, with_attn)

    results = pl.pallas_call(
        kernel,
        out_shape=tuple(out_shapes),
        grid_spec=pltpu.PrefetchScalarGridSpec(
            num_scalar_prefetch=0,
            grid=(nb, L),                                   # (batch tiles, layers)
            in_specs=[
                pl.BlockSpec((Bt, S, D), lambda b, l: (b, 0, 0)),   # emb+pos acts
                pl.BlockSpec((Bt, 1, S), lambda b, l: (b, 0, 0)),   # pad bias
                layer_spec((D, n_heads * d_k)),                     # W_Q (scaled)
                layer_spec((D, n_heads * d_k)),                     # W_K
                layer_spec((D, n_heads * d_v)),                     # W_V
                layer_spec((n_heads * d_v, D)),                     # fc
                layer_spec((1, D)), layer_spec((1, D)),             # ln1 gamma/beta
                layer_spec((D, d_ff)), layer_spec((d_ff, D)),       # FFN W1, W2
                layer_spec((1, D)), layer_spec((1, D)),             # ln2 gamma/beta
            ],
            out_specs=tuple(out_specs),
            scratch_shapes=[pltpu.VMEM((Bt * S, D), jnp.float32)],  # layer carry
        ),
        compiler_params=pltpu.CompilerParams(
            dimension_semantics=("parallel", "arbitrary"),
            vmem_limit_bytes=_vmem_limit_bytes()),
    )(x, bias,
      packed['wq'], packed['wk'], packed['wv'], packed['wo'],
      packed['g1'], packed['b1'], packed['w1'], packed['w2'],
      packed['g2'], packed['b2'])

    if with_attn:
        out, attn = results
        return out, attn
    out = results[0] if isinstance(results, (tuple, list)) else results
    return out, None


# ----------------------------------------------------------------------------
# Glue: embedding, positional encoding, pad bias, parameter packing/init.
# ----------------------------------------------------------------------------
def positional_encoding(max_len, d_model):
    position = jnp.arange(max_len, dtype=jnp.float32)[:, None]
    div_term = jnp.exp(jnp.arange(0, d_model, 2, dtype=jnp.float32)
                       * (-math.log(10000.0) / d_model))
    pe = jnp.zeros((max_len, d_model), dtype=jnp.float32)
    pe = pe.at[:, 0::2].set(jnp.sin(position * div_term))
    pe = pe.at[:, 1::2].set(jnp.cos(position * div_term))
    return pe  # (max_len, d_model)


def init_params(key, vocab_size, d_model, d_ff, d_k, d_v, n_heads, n_layers):
    keys = jax.random.split(key, 1 + n_layers)
    params = {'embed': 0.02 * jax.random.normal(keys[0], (vocab_size, d_model),
                                                dtype=jnp.float32)}
    layers = []
    for l in range(n_layers):
        k = jax.random.split(keys[1 + l], 6)
        layers.append({
            'wq': 0.1 * jax.random.normal(k[0], (d_model, n_heads * d_k), jnp.float32),
            'wk': 0.1 * jax.random.normal(k[1], (d_model, n_heads * d_k), jnp.float32),
            'wv': 0.1 * jax.random.normal(k[2], (d_model, n_heads * d_v), jnp.float32),
            'wo': 0.1 * jax.random.normal(k[3], (n_heads * d_v, d_model), jnp.float32),
            'ln1_g': jnp.ones((d_model,), jnp.float32),
            'ln1_b': jnp.zeros((d_model,), jnp.float32),
            'w1': 0.1 * jax.random.normal(k[4], (d_model, d_ff), jnp.float32),
            'w2': 0.1 * jax.random.normal(k[5], (d_ff, d_model), jnp.float32),
            'ln2_g': jnp.ones((d_model,), jnp.float32),
            'ln2_b': jnp.zeros((d_model,), jnp.float32),
        })
    params['layers'] = layers
    return params


def pack_layer_params(layers, d_k, dtype=jnp.float32):
    """Stack per-layer weights (leading layer axis); fold 1/sqrt(d_k) into W_Q."""
    stack = lambda name: jnp.stack([lp[name] for lp in layers])
    scale = 1.0 / math.sqrt(d_k)
    return {
        'wq': (stack('wq') * scale).astype(dtype),   # (L, D, H*dk), scale folded
        'wk': stack('wk').astype(dtype),             # (L, D, H*dk)
        'wv': stack('wv').astype(dtype),             # (L, D, H*dv)
        'wo': stack('wo').astype(dtype),             # (L, H*dv, D)
        'w1': stack('w1').astype(dtype),             # (L, D, d_ff)
        'w2': stack('w2').astype(dtype),             # (L, d_ff, D)
        'g1': stack('ln1_g')[:, None, :], 'b1': stack('ln1_b')[:, None, :],
        'g2': stack('ln2_g')[:, None, :], 'b2': stack('ln2_b')[:, None, :],
    }


def encoder_forward(x_ids, params, *, d_k, d_v, n_heads, max_len,
                    use_bf16=False, with_attn=True):
    """x_ids: (B, S) int32 token ids (0 = pad).  Returns (out, [attn per layer])."""
    B, S = x_ids.shape
    d_model = params['embed'].shape[1]
    assert S <= max_len and d_model % 2 == 0
    out = params['embed'][x_ids]                                 # gather (glue)
    out = out + positional_encoding(max_len, d_model)[None, :S, :]
    # dropout(p=0.1) is identity at inference
    # pad mask shipped compactly as an additive bias: (B, 1, S), 0 or -1e9
    bias = jnp.where(x_ids == 0, -1e9, 0.0).astype(jnp.float32)[:, None, :]
    # NOTE: set use_bf16=True for production on v5e/v6e/v7x (bf16 MXU operands,
    # f32 accumulate) — it will not satisfy the tight tolerances checked below.
    packed = pack_layer_params(params['layers'], d_k,
                               dtype=jnp.bfloat16 if use_bf16 else jnp.float32)
    out, attn_all = encoder_layers_pallas(out.astype(jnp.float32), bias, packed,
                                          n_heads=n_heads, d_k=d_k, d_v=d_v,
                                          with_attn=with_attn)
    if not with_attn:
        return out, None
    n_layers = len(params['layers'])
    attns = [jnp.transpose(attn_all[l], (1, 0, 2, 3)) for l in range(n_layers)]
    return out, attns


# ----------------------------------------------------------------------------
# Pure-JAX reference (correctness sanity check).
# ----------------------------------------------------------------------------
def _layernorm(x, g, b):
    mu = jnp.mean(x, axis=-1, keepdims=True)
    var = jnp.mean((x - mu) ** 2, axis=-1, keepdims=True)
    return (x - mu) / jnp.sqrt(var + 1e-5) * g + b


def encoder_forward_ref(x_ids, params, *, d_k, d_v, n_heads, max_len):
    B, S = x_ids.shape
    d_model = params['embed'].shape[1]
    out = params['embed'][x_ids]
    out = out + positional_encoding(max_len, d_model)[None, :S, :]
    pad = (x_ids == 0)
    mask = jnp.broadcast_to(pad[:, None, :], (B, S, S))
    attns = []
    for lp in params['layers']:
        res = out
        q = (out @ lp['wq']).reshape(B, S, n_heads, d_k).transpose(0, 2, 1, 3)
        k = (out @ lp['wk']).reshape(B, S, n_heads, d_k).transpose(0, 2, 1, 3)
        v = (out @ lp['wv']).reshape(B, S, n_heads, d_v).transpose(0, 2, 1, 3)
        scores = jnp.einsum('bhqd,bhkd->bhqk', q, k) / math.sqrt(d_k)
        scores = jnp.where(mask[:, None, :, :], -1e9, scores)
        attn = jax.nn.softmax(scores, axis=-1)
        ctx = jnp.einsum('bhqk,bhkd->bhqd', attn, v)
        ctx = ctx.transpose(0, 2, 1, 3).reshape(B, S, n_heads * d_v)
        out = _layernorm(ctx @ lp['wo'] + res, lp['ln1_g'], lp['ln1_b'])
        res2 = out
        ff = jnp.maximum(out @ lp['w1'], 0.0) @ lp['w2']
        out = _layernorm(ff + res2, lp['ln2_g'], lp['ln2_b'])
        attns.append(attn)
    return out, attns


# ----------------------------------------------------------------------------
if __name__ == "__main__":
    B, S = 2, 8
    d_model, d_ff, d_k, d_v, n_heads, n_layers = 32, 64, 8, 8, 4, 2
    max_len = 64

    key = jax.random.PRNGKey(0)
    k_ids, k_params = jax.random.split(key)

    # token ids in [1, VOCAB_SIZE), with trailing pad (0) tokens
    x_ids = jax.random.randint(k_ids, (B, S), 1, VOCAB_SIZE, dtype=jnp.int32)
    x_ids = x_ids.at[0, 6:].set(0).at[1, 5:].set(0)

    params = init_params(k_params, VOCAB_SIZE, d_model, d_ff, d_k, d_v,
                         n_heads, n_layers)

    out, attns = encoder_forward(x_ids, params, d_k=d_k, d_v=d_v,
                                 n_heads=n_heads, max_len=max_len)
    out = jax.block_until_ready(out)
    attns = [jax.block_until_ready(a) for a in attns]

    # sanity-check against pure-JAX reference
    out_ref, attns_ref = encoder_forward_ref(x_ids, params, d_k=d_k, d_v=d_v,
                                             n_heads=n_heads, max_len=max_len)
    assert out.shape == (B, S, d_model)
    assert all(a.shape == (B, n_heads, S, S) for a in attns)
    assert jnp.allclose(out, out_ref, atol=1e-4, rtol=1e-4)
    for a, ar in zip(attns, attns_ref):
        assert jnp.allclose(a, ar, atol=1e-5, rtol=1e-4)

    print("KERNEL_OK")
</pallas_src>

<mosaic_0001>
module attributes {stable_mosaic.version = 11 : i64} {
  func.func @kernel(%arg0: i32, %arg1: i32, %arg2: memref<1x8x32xf32, #tpu.memory_space<vmem>>, %arg3: memref<1x1x8xf32, #tpu.memory_space<vmem>>, %arg4: memref<1x32x32xf32, #tpu.memory_space<vmem>>, %arg5: memref<1x32x32xf32, #tpu.memory_space<vmem>>, %arg6: memref<1x32x32xf32, #tpu.memory_space<vmem>>, %arg7: memref<1x32x32xf32, #tpu.memory_space<vmem>>, %arg8: memref<1x1x32xf32, #tpu.memory_space<vmem>>, %arg9: memref<1x1x32xf32, #tpu.memory_space<vmem>>, %arg10: memref<1x32x64xf32, #tpu.memory_space<vmem>>, %arg11: memref<1x64x32xf32, #tpu.memory_space<vmem>>, %arg12: memref<1x1x32xf32, #tpu.memory_space<vmem>>, %arg13: memref<1x1x32xf32, #tpu.memory_space<vmem>>, %arg14: memref<1x8x32xf32, #tpu.memory_space<vmem>>, %arg15: memref<1x4x1x8x8xf32, #tpu.memory_space<vmem>>, %arg16: memref<8x32xf32, #tpu.memory_space<vmem>>) attributes {dimension_semantics = [#tpu.dimension_semantics<parallel>, #tpu.dimension_semantics<arbitrary>], iteration_bounds = array<i64: 2, 2>, scalar_prefetch = 0 : i64, scratch_operands = 1 : i64, tpu.core_type = #tpu.core_type<tc>, window_params = [{transform_indices = @transform_0, window_bounds = array<i64: 1, 8, 32>}, {transform_indices = @transform_1, window_bounds = array<i64: 1, 1, 8>}, {transform_indices = @transform_2, window_bounds = array<i64: 1, 32, 32>}, {transform_indices = @transform_3, window_bounds = array<i64: 1, 32, 32>}, {transform_indices = @transform_4, window_bounds = array<i64: 1, 32, 32>}, {transform_indices = @transform_5, window_bounds = array<i64: 1, 32, 32>}, {transform_indices = @transform_6, window_bounds = array<i64: 1, 1, 32>}, {transform_indices = @transform_7, window_bounds = array<i64: 1, 1, 32>}, {transform_indices = @transform_8, window_bounds = array<i64: 1, 32, 64>}, {transform_indices = @transform_9, window_bounds = array<i64: 1, 64, 32>}, {transform_indices = @transform_10, window_bounds = array<i64: 1, 1, 32>}, {transform_indices = @transform_11, window_bounds = array<i64: 1, 1, 32>}, {transform_indices = @transform_12, window_bounds = array<i64: 1, 8, 32>}, {transform_indices = @transform_13, window_bounds = array<i64: 1, 4, 1, 8, 8>}]} {
    %c0_i32 = arith.constant 0 : i32
    %0 = arith.cmpi eq, %arg1, %c0_i32 : i32
    %1 = arith.extui %0 : i1 to i32
    %c0_i32_0 = arith.constant 0 : i32
    %2 = arith.cmpi ne, %1, %c0_i32_0 : i32
    scf.if %2 {
      %c0_91 = arith.constant 0 : index
      %c0_92 = arith.constant 0 : index
      %c0_93 = arith.constant 0 : index
      %186 = vector.load %arg2[%c0_91, %c0_92, %c0_93] : memref<1x8x32xf32, #tpu.memory_space<vmem>>, vector<1x8x32xf32>
      %187 = vector.shape_cast %186 : vector<1x8x32xf32> to vector<8x32xf32>
      %c0_94 = arith.constant 0 : index
      %c0_95 = arith.constant 0 : index
      %188 = vector.load %arg16[%c0_94, %c0_95] : memref<8x32xf32, #tpu.memory_space<vmem>>, vector<8x32xf32>
      tpu.vector_store %arg16[%c0_94, %c0_95], %187 {strides = array<i32>} : memref<8x32xf32, #tpu.memory_space<vmem>>, vector<8x32xf32>,
    } else {
    }
    %c0 = arith.constant 0 : index
    %c0_1 = arith.constant 0 : index
    %3 = vector.load %arg16[%c0, %c0_1] : memref<8x32xf32, #tpu.memory_space<vmem>>, vector<8x32xf32>
    %c0_2 = arith.constant 0 : index
    %c0_3 = arith.constant 0 : index
    %c0_4 = arith.constant 0 : index
    %4 = vector.load %arg3[%c0_2, %c0_3, %c0_4] : memref<1x1x8xf32, #tpu.memory_space<vmem>>, vector<1x1x8xf32>
    %c0_5 = arith.constant 0 : index
    %c0_6 = arith.constant 0 : index
    %c0_7 = arith.constant 0 : index
    %5 = vector.load %arg4[%c0_5, %c0_6, %c0_7] : memref<1x32x32xf32, #tpu.memory_space<vmem>>, vector<1x32x32xf32>
    %6 = vector.shape_cast %5 : vector<1x32x32xf32> to vector<32x32xf32>
    %cst = arith.constant dense<0.000000e+00> : vector<8x32xf32>
    %7 = tpu.matmul %3, %6, %cst {dimension_numbers = #tpu.dot_dimension_numbers<[1], [0], [0], [1], [0, 0, 1, 1], [], []>} : vector<8x32xf32>, vector<32x32xf32>, vector<8x32xf32> -> vector<8x32xf32>
    %c0_8 = arith.constant 0 : index
    %c0_9 = arith.constant 0 : index
    %c0_10 = arith.constant 0 : index
    %8 = vector.load %arg5[%c0_8, %c0_9, %c0_10] : memref<1x32x32xf32, #tpu.memory_space<vmem>>, vector<1x32x32xf32>
    %9 = vector.shape_cast %8 : vector<1x32x32xf32> to vector<32x32xf32>
    %cst_11 = arith.constant dense<0.000000e+00> : vector<8x32xf32>
    %10 = tpu.matmul %3, %9, %cst_11 {dimension_numbers = #tpu.dot_dimension_numbers<[1], [0], [0], [1], [0, 0, 1, 1], [], []>} : vector<8x32xf32>, vector<32x32xf32>, vector<8x32xf32> -> vector<8x32xf32>
    %c0_12 = arith.constant 0 : index
    %c0_13 = arith.constant 0 : index
    %c0_14 = arith.constant 0 : index
    %11 = vector.load %arg6[%c0_12, %c0_13, %c0_14] : memref<1x32x32xf32, #tpu.memory_space<vmem>>, vector<1x32x32xf32>
    %12 = vector.shape_cast %11 : vector<1x32x32xf32> to vector<32x32xf32>
    %cst_15 = arith.constant dense<0.000000e+00> : vector<8x32xf32>
    %13 = tpu.matmul %3, %12, %cst_15 {dimension_numbers = #tpu.dot_dimension_numbers<[1], [0], [0], [1], [0, 0, 1, 1], [], []>} : vector<8x32xf32>, vector<32x32xf32>, vector<8x32xf32> -> vector<8x32xf32>
    %14 = vector.extract_strided_slice %7 {offsets = [0, 0], sizes = [8, 8], strides = [1, 1]} : vector<8x32xf32> to vector<8x8xf32>
    %15 = vector.shape_cast %14 : vector<8x8xf32> to vector<1x8x8xf32>
    %16 = vector.extract_strided_slice %10 {offsets = [0, 0], sizes = [8, 8], strides = [1, 1]} : vector<8x32xf32> to vector<8x8xf32>
    %17 = vector.shape_cast %16 : vector<8x8xf32> to vector<1x8x8xf32>
    %18 = vector.extract_strided_slice %13 {offsets = [0, 0], sizes = [8, 8], strides = [1, 1]} : vector<8x32xf32> to vector<8x8xf32>
    %19 = vector.shape_cast %18 : vector<8x8xf32> to vector<1x8x8xf32>
    "tpu.trace_start"() <{level = 10 : i32, message = "bqd,bkd->bqk"}> : () -> ()
    %cst_16 = arith.constant dense<0.000000e+00> : vector<1x8x8xf32>
    %20 = tpu.matmul %15, %17, %cst_16 {dimension_numbers = #tpu.dot_dimension_numbers<[2], [2], [1], [1], [0, 0, 0, 1, 1, 1], [0], [0]>} : vector<1x8x8xf32>, vector<1x8x8xf32>, vector<1x8x8xf32> -> vector<1x8x8xf32>
    "tpu.trace_stop"() : () -> ()
    %21 = vector.broadcast %4 : vector<1x1x8xf32> to vector<1x8x8xf32>
    %22 = arith.addf %20, %21 : vector<1x8x8xf32>
    %cst_17 = arith.constant dense<0xFF800000> : vector<1x8xf32>
    %23 = vector.multi_reduction <maximumf>, %22, %cst_17 [2] : vector<1x8x8xf32> to vector<1x8xf32>
    %24 = vector.shape_cast %23 : vector<1x8xf32> to vector<1x8x1xf32>
    %25 = vector.broadcast %24 : vector<1x8x1xf32> to vector<1x8x8xf32>
    %26 = arith.subf %22, %25 : vector<1x8x8xf32>
    %27 = math.exp %26 : vector<1x8x8xf32>
    %cst_18 = arith.constant dense<0.000000e+00> : vector<1x8xf32>
    %28 = vector.multi_reduction <add>, %27, %cst_18 [2] : vector<1x8x8xf32> to vector<1x8xf32>
    %29 = vector.shape_cast %28 : vector<1x8xf32> to vector<1x8x1xf32>
    %cst_19 = arith.constant 1.000000e+00 : f32
    %30 = vector.broadcast %cst_19 : f32 to vector<1x8x1xf32>
    %31 = arith.divf %30, %29 : vector<1x8x1xf32>
    %32 = vector.broadcast %31 : vector<1x8x1xf32> to vector<1x8x8xf32>
    %33 = arith.mulf %27, %32 : vector<1x8x8xf32>
    %c0_20 = arith.constant 0 : index
    %c0_21 = arith.constant 0 : index
    %c0_22 = arith.constant 0 : index
    %c0_23 = arith.constant 0 : index
    %c0_24 = arith.constant 0 : index
    %34 = vector.load %arg15[%c0_20, %c0_21, %c0_22, %c0_23, %c0_24] : memref<1x4x1x8x8xf32, #tpu.memory_space<vmem>>, vector<1x1x1x8x8xf32>
    %35 = vector.shape_cast %34 : vector<1x1x1x8x8xf32> to vector<1x8x8xf32>
    %36 = vector.shape_cast %33 : vector<1x8x8xf32> to vector<1x1x1x8x8xf32>
    tpu.vector_store %arg15[%c0_20, %c0_21, %c0_22, %c0_23, %c0_24], %36 {strides = array<i32>} : memref<1x4x1x8x8xf32, #tpu.memory_space<vmem>>, vector<1x1x1x8x8xf32>,
    "tpu.trace_start"() <{level = 10 : i32, message = "bqk,bkd->bqd"}> : () -> ()
    %cst_25 = arith.constant dense<0.000000e+00> : vector<1x8x8xf32>
    %37 = tpu.matmul %33, %19, %cst_25 {dimension_numbers = #tpu.dot_dimension_numbers<[2], [1], [1], [2], [0, 0, 0, 1, 1, 2], [0], [0]>} : vector<1x8x8xf32>, vector<1x8x8xf32>, vector<1x8x8xf32> -> vector<1x8x8xf32>
    "tpu.trace_stop"() : () -> ()
    %38 = vector.shape_cast %37 : vector<1x8x8xf32> to vector<8x8xf32>
    %39 = vector.extract_strided_slice %7 {offsets = [0, 8], sizes = [8, 8], strides = [1, 1]} : vector<8x32xf32> to vector<8x8xf32>
    %40 = vector.shape_cast %39 : vector<8x8xf32> to vector<1x8x8xf32>
    %41 = vector.extract_strided_slice %10 {offsets = [0, 8], sizes = [8, 8], strides = [1, 1]} : vector<8x32xf32> to vector<8x8xf32>
    %42 = vector.shape_cast %41 : vector<8x8xf32> to vector<1x8x8xf32>
    %43 = vector.extract_strided_slice %13 {offsets = [0, 8], sizes = [8, 8], strides = [1, 1]} : vector<8x32xf32> to vector<8x8xf32>
    %44 = vector.shape_cast %43 : vector<8x8xf32> to vector<1x8x8xf32>
    "tpu.trace_start"() <{level = 10 : i32, message = "bqd,bkd->bqk"}> : () -> ()
    %cst_26 = arith.constant dense<0.000000e+00> : vector<1x8x8xf32>
    %45 = tpu.matmul %40, %42, %cst_26 {dimension_numbers = #tpu.dot_dimension_numbers<[2], [2], [1], [1], [0, 0, 0, 1, 1, 1], [0], [0]>} : vector<1x8x8xf32>, vector<1x8x8xf32>, vector<1x8x8xf32> -> vector<1x8x8xf32>
    "tpu.trace_stop"() : () -> ()
    %46 = vector.broadcast %4 : vector<1x1x8xf32> to vector<1x8x8xf32>
    %47 = arith.addf %45, %46 : vector<1x8x8xf32>
    %cst_27 = arith.constant dense<0xFF800000> : vector<1x8xf32>
    %48 = vector.multi_reduction <maximumf>, %47, %cst_27 [2] : vector<1x8x8xf32> to vector<1x8xf32>
    %49 = vector.shape_cast %48 : vector<1x8xf32> to vector<1x8x1xf32>
    %50 = vector.broadcast %49 : vector<1x8x1xf32> to vector<1x8x8xf32>
    %51 = arith.subf %47, %50 : vector<1x8x8xf32>
    %52 = math.exp %51 : vector<1x8x8xf32>
    %cst_28 = arith.constant dense<0.000000e+00> : vector<1x8xf32>
    %53 = vector.multi_reduction <add>, %52, %cst_28 [2] : vector<1x8x8xf32> to vector<1x8xf32>
    %54 = vector.shape_cast %53 : vector<1x8xf32> to vector<1x8x1xf32>
    %cst_29 = arith.constant 1.000000e+00 : f32
    %55 = vector.broadcast %cst_29 : f32 to vector<1x8x1xf32>
    %56 = arith.divf %55, %54 : vector<1x8x1xf32>
    %57 = vector.broadcast %56 : vector<1x8x1xf32> to vector<1x8x8xf32>
    %58 = arith.mulf %52, %57 : vector<1x8x8xf32>
    %c0_30 = arith.constant 0 : index
    %c1 = arith.constant 1 : index
    %c0_31 = arith.constant 0 : index
    %c0_32 = arith.constant 0 : index
    %c0_33 = arith.constant 0 : index
    %59 = vector.load %arg15[%c0_30, %c1, %c0_31, %c0_32, %c0_33] : memref<1x4x1x8x8xf32, #tpu.memory_space<vmem>>, vector<1x1x1x8x8xf32>
    %60 = vector.shape_cast %59 : vector<1x1x1x8x8xf32> to vector<1x8x8xf32>
    %61 = vector.shape_cast %58 : vector<1x8x8xf32> to vector<1x1x1x8x8xf32>
    tpu.vector_store %arg15[%c0_30, %c1, %c0_31, %c0_32, %c0_33], %61 {strides = array<i32>} : memref<1x4x1x8x8xf32, #tpu.memory_space<vmem>>, vector<1x1x1x8x8xf32>,
    "tpu.trace_start"() <{level = 10 : i32, message = "bqk,bkd->bqd"}> : () -> ()
    %cst_34 = arith.constant dense<0.000000e+00> : vector<1x8x8xf32>
    %62 = tpu.matmul %58, %44, %cst_34 {dimension_numbers = #tpu.dot_dimension_numbers<[2], [1], [1], [2], [0, 0, 0, 1, 1, 2], [0], [0]>} : vector<1x8x8xf32>, vector<1x8x8xf32>, vector<1x8x8xf32> -> vector<1x8x8xf32>
    "tpu.trace_stop"() : () -> ()
    %63 = vector.shape_cast %62 : vector<1x8x8xf32> to vector<8x8xf32>
    %64 = vector.extract_strided_slice %7 {offsets = [0, 16], sizes = [8, 8], strides = [1, 1]} : vector<8x32xf32> to vector<8x8xf32>
    %65 = vector.shape_cast %64 : vector<8x8xf32> to vector<1x8x8xf32>
    %66 = vector.extract_strided_slice %10 {offsets = [0, 16], sizes = [8, 8], strides = [1, 1]} : vector<8x32xf32> to vector<8x8xf32>
    %67 = vector.shape_cast %66 : vector<8x8xf32> to vector<1x8x8xf32>
    %68 = vector.extract_strided_slice %13 {offsets = [0, 16], sizes = [8, 8], strides = [1, 1]} : vector<8x32xf32> to vector<8x8xf32>
    %69 = vector.shape_cast %68 : vector<8x8xf32> to vector<1x8x8xf32>
    "tpu.trace_start"() <{level = 10 : i32, message = "bqd,bkd->bqk"}> : () -> ()
    %cst_35 = arith.constant dense<0.000000e+00> : vector<1x8x8xf32>
    %70 = tpu.matmul %65, %67, %cst_35 {dimension_numbers = #tpu.dot_dimension_numbers<[2], [2], [1], [1], [0, 0, 0, 1, 1, 1], [0], [0]>} : vector<1x8x8xf32>, vector<1x8x8xf32>, vector<1x8x8xf32> -> vector<1x8x8xf32>
    "tpu.trace_stop"() : () -> ()
    %71 = vector.broadcast %4 : vector<1x1x8xf32> to vector<1x8x8xf32>
    %72 = arith.addf %70, %71 : vector<1x8x8xf32>
    %cst_36 = arith.constant dense<0xFF800000> : vector<1x8xf32>
    %73 = vector.multi_reduction <maximumf>, %72, %cst_36 [2] : vector<1x8x8xf32> to vector<1x8xf32>
    %74 = vector.shape_cast %73 : vector<1x8xf32> to vector<1x8x1xf32>
    %75 = vector.broadcast %74 : vector<1x8x1xf32> to vector<1x8x8xf32>
    %76 = arith.subf %72, %75 : vector<1x8x8xf32>
    %77 = math.exp %76 : vector<1x8x8xf32>
    %cst_37 = arith.constant dense<0.000000e+00> : vector<1x8xf32>
    %78 = vector.multi_reduction <add>, %77, %cst_37 [2] : vector<1x8x8xf32> to vector<1x8xf32>
    %79 = vector.shape_cast %78 : vector<1x8xf32> to vector<1x8x1xf32>
    %cst_38 = arith.constant 1.000000e+00 : f32
    %80 = vector.broadcast %cst_38 : f32 to vector<1x8x1xf32>
    %81 = arith.divf %80, %79 : vector<1x8x1xf32>
    %82 = vector.broadcast %81 : vector<1x8x1xf32> to vector<1x8x8xf32>
    %83 = arith.mulf %77, %82 : vector<1x8x8xf32>
    %c0_39 = arith.constant 0 : index
    %c2 = arith.constant 2 : index
    %c0_40 = arith.constant 0 : index
    %c0_41 = arith.constant 0 : index
    %c0_42 = arith.constant 0 : index
    %84 = vector.load %arg15[%c0_39, %c2, %c0_40, %c0_41, %c0_42] : memref<1x4x1x8x8xf32, #tpu.memory_space<vmem>>, vector<1x1x1x8x8xf32>
    %85 = vector.shape_cast %84 : vector<1x1x1x8x8xf32> to vector<1x8x8xf32>
    %86 = vector.shape_cast %83 : vector<1x8x8xf32> to vector<1x1x1x8x8xf32>
    tpu.vector_store %arg15[%c0_39, %c2, %c0_40, %c0_41, %c0_42], %86 {strides = array<i32>} : memref<1x4x1x8x8xf32, #tpu.memory_space<vmem>>, vector<1x1x1x8x8xf32>,
    "tpu.trace_start"() <{level = 10 : i32, message = "bqk,bkd->bqd"}> : () -> ()
    %cst_43 = arith.constant dense<0.000000e+00> : vector<1x8x8xf32>
    %87 = tpu.matmul %83, %69, %cst_43 {dimension_numbers = #tpu.dot_dimension_numbers<[2], [1], [1], [2], [0, 0, 0, 1, 1, 2], [0], [0]>} : vector<1x8x8xf32>, vector<1x8x8xf32>, vector<1x8x8xf32> -> vector<1x8x8xf32>
    "tpu.trace_stop"() : () -> ()
    %88 = vector.shape_cast %87 : vector<1x8x8xf32> to vector<8x8xf32>
    %89 = vector.extract_strided_slice %7 {offsets = [0, 24], sizes = [8, 8], strides = [1, 1]} : vector<8x32xf32> to vector<8x8xf32>
    %90 = vector.shape_cast %89 : vector<8x8xf32> to vector<1x8x8xf32>
    %91 = vector.extract_strided_slice %10 {offsets = [0, 24], sizes = [8, 8], strides = [1, 1]} : vector<8x32xf32> to vector<8x8xf32>
    %92 = vector.shape_cast %91 : vector<8x8xf32> to vector<1x8x8xf32>
    %93 = vector.extract_strided_slice %13 {offsets = [0, 24], sizes = [8, 8], strides = [1, 1]} : vector<8x32xf32> to vector<8x8xf32>
    %94 = vector.shape_cast %93 : vector<8x8xf32> to vector<1x8x8xf32>
    "tpu.trace_start"() <{level = 10 : i32, message = "bqd,bkd->bqk"}> : () -> ()
    %cst_44 = arith.constant dense<0.000000e+00> : vector<1x8x8xf32>
    %95 = tpu.matmul %90, %92, %cst_44 {dimension_numbers = #tpu.dot_dimension_numbers<[2], [2], [1], [1], [0, 0, 0, 1, 1, 1], [0], [0]>} : vector<1x8x8xf32>, vector<1x8x8xf32>, vector<1x8x8xf32> -> vector<1x8x8xf32>
    "tpu.trace_stop"() : () -> ()
    %96 = vector.broadcast %4 : vector<1x1x8xf32> to vector<1x8x8xf32>
    %97 = arith.addf %95, %96 : vector<1x8x8xf32>
    %cst_45 = arith.constant dense<0xFF800000> : vector<1x8xf32>
    %98 = vector.multi_reduction <maximumf>, %97, %cst_45 [2] : vector<1x8x8xf32> to vector<1x8xf32>
    %99 = vector.shape_cast %98 : vector<1x8xf32> to vector<1x8x1xf32>
    %100 = vector.broadcast %99 : vector<1x8x1xf32> to vector<1x8x8xf32>
    %101 = arith.subf %97, %100 : vector<1x8x8xf32>
    %102 = math.exp %101 : vector<1x8x8xf32>
    %cst_46 = arith.constant dense<0.000000e+00> : vector<1x8xf32>
    %103 = vector.multi_reduction <add>, %102, %cst_46 [2] : vector<1x8x8xf32> to vector<1x8xf32>
    %104 = vector.shape_cast %103 : vector<1x8xf32> to vector<1x8x1xf32>
    %cst_47 = arith.constant 1.000000e+00 : f32
    %105 = vector.broadcast %cst_47 : f32 to vector<1x8x1xf32>
    %106 = arith.divf %105, %104 : vector<1x8x1xf32>
    %107 = vector.broadcast %106 : vector<1x8x1xf32> to vector<1x8x8xf32>
    %108 = arith.mulf %102, %107 : vector<1x8x8xf32>
    %c0_48 = arith.constant 0 : index
    %c3 = arith.constant 3 : index
    %c0_49 = arith.constant 0 : index
    %c0_50 = arith.constant 0 : index
    %c0_51 = arith.constant 0 : index
    %109 = vector.load %arg15[%c0_48, %c3, %c0_49, %c0_50, %c0_51] : memref<1x4x1x8x8xf32, #tpu.memory_space<vmem>>, vector<1x1x1x8x8xf32>
    %110 = vector.shape_cast %109 : vector<1x1x1x8x8xf32> to vector<1x8x8xf32>
    %111 = vector.shape_cast %108 : vector<1x8x8xf32> to vector<1x1x1x8x8xf32>
    tpu.vector_store %arg15[%c0_48, %c3, %c0_49, %c0_50, %c0_51], %111 {strides = array<i32>} : memref<1x4x1x8x8xf32, #tpu.memory_space<vmem>>, vector<1x1x1x8x8xf32>,
    "tpu.trace_start"() <{level = 10 : i32, message = "bqk,bkd->bqd"}> : () -> ()
    %cst_52 = arith.constant dense<0.000000e+00> : vector<1x8x8xf32>
    %112 = tpu.matmul %108, %94, %cst_52 {dimension_numbers = #tpu.dot_dimension_numbers<[2], [1], [1], [2], [0, 0, 0, 1, 1, 2], [0], [0]>} : vector<1x8x8xf32>, vector<1x8x8xf32>, vector<1x8x8xf32> -> vector<1x8x8xf32>
    "tpu.trace_stop"() : () -> ()
    %113 = vector.shape_cast %112 : vector<1x8x8xf32> to vector<8x8xf32>
    %114 = tpu.concatenate %38, %63, %88, %113 in 1 : vector<8x8xf32>, vector<8x8xf32>, vector<8x8xf32>, vector<8x8xf32> -> vector<8x32xf32>
    %c0_53 = arith.constant 0 : index
    %c0_54 = arith.constant 0 : index
    %c0_55 = arith.constant 0 : index
    %115 = vector.load %arg7[%c0_53, %c0_54, %c0_55] : memref<1x32x32xf32, #tpu.memory_space<vmem>>, vector<1x32x32xf32>
    %116 = vector.shape_cast %115 : vector<1x32x32xf32> to vector<32x32xf32>
    %cst_56 = arith.constant dense<0.000000e+00> : vector<8x32xf32>
    %117 = tpu.matmul %114, %116, %cst_56 {dimension_numbers = #tpu.dot_dimension_numbers<[1], [0], [0], [1], [0, 0, 1, 1], [], []>} : vector<8x32xf32>, vector<32x32xf32>, vector<8x32xf32> -> vector<8x32xf32>
    %118 = arith.addf %117, %3 : vector<8x32xf32>
    %cst_57 = arith.constant dense<0.000000e+00> : vector<8xf32>
    %119 = vector.multi_reduction <add>, %118, %cst_57 [1] : vector<8x32xf32> to vector<8xf32>
    %120 = vector.shape_cast %119 : vector<8xf32> to vector<8x1xf32>
    %cst_58 = arith.constant 3.200000e+01 : f32
    %121 = vector.broadcast %cst_58 : f32 to vector<8x1xf32>
    %122 = arith.divf %120, %121 : vector<8x1xf32>
    %123 = vector.broadcast %122 : vector<8x1xf32> to vector<8x32xf32>
    %124 = arith.subf %118, %123 : vector<8x32xf32>
    %125 = arith.mulf %124, %124 : vector<8x32xf32>
    %cst_59 = arith.constant dense<0.000000e+00> : vector<8xf32>
    %126 = vector.multi_reduction <add>, %125, %cst_59 [1] : vector<8x32xf32> to vector<8xf32>
    %127 = vector.shape_cast %126 : vector<8xf32> to vector<8x1xf32>
    %cst_60 = arith.constant 3.200000e+01 : f32
    %128 = vector.broadcast %cst_60 : f32 to vector<8x1xf32>
    %129 = arith.divf %127, %128 : vector<8x1xf32>
    %130 = vector.broadcast %122 : vector<8x1xf32> to vector<8x32xf32>
    %131 = arith.subf %118, %130 : vector<8x32xf32>
    %cst_61 = arith.constant 9.99999974E-6 : f32
    %132 = vector.broadcast %cst_61 : f32 to vector<8x1xf32>
    %133 = arith.addf %129, %132 : vector<8x1xf32>
    %134 = math.rsqrt %133 : vector<8x1xf32>
    %135 = vector.broadcast %134 : vector<8x1xf32> to vector<8x32xf32>
    %136 = arith.mulf %131, %135 : vector<8x32xf32>
    %c0_62 = arith.constant 0 : index
    %c0_63 = arith.constant 0 : index
    %c0_64 = arith.constant 0 : index
    %137 = vector.load %arg8[%c0_62, %c0_63, %c0_64] : memref<1x1x32xf32, #tpu.memory_space<vmem>>, vector<1x1x32xf32>
    %138 = vector.shape_cast %137 : vector<1x1x32xf32> to vector<1x32xf32>
    %139 = vector.broadcast %138 : vector<1x32xf32> to vector<8x32xf32>
    %140 = arith.mulf %136, %139 : vector<8x32xf32>
    %c0_65 = arith.constant 0 : index
    %c0_66 = arith.constant 0 : index
    %c0_67 = arith.constant 0 : index
    %141 = vector.load %arg9[%c0_65, %c0_66, %c0_67] : memref<1x1x32xf32, #tpu.memory_space<vmem>>, vector<1x1x32xf32>
    %142 = vector.shape_cast %141 : vector<1x1x32xf32> to vector<1x32xf32>
    %143 = vector.broadcast %142 : vector<1x32xf32> to vector<8x32xf32>
    %144 = arith.addf %140, %143 : vector<8x32xf32>
    %c0_68 = arith.constant 0 : index
    %c0_69 = arith.constant 0 : index
    %c0_70 = arith.constant 0 : index
    %145 = vector.load %arg10[%c0_68, %c0_69, %c0_70] : memref<1x32x64xf32, #tpu.memory_space<vmem>>, vector<1x32x64xf32>
    %146 = vector.shape_cast %145 : vector<1x32x64xf32> to vector<32x64xf32>
    %cst_71 = arith.constant dense<0.000000e+00> : vector<8x64xf32>
    %147 = tpu.matmul %144, %146, %cst_71 {dimension_numbers = #tpu.dot_dimension_numbers<[1], [0], [0], [1], [0, 0, 1, 1], [], []>} : vector<8x32xf32>, vector<32x64xf32>, vector<8x64xf32> -> vector<8x64xf32>
    %cst_72 = arith.constant 0.000000e+00 : f32
    %148 = vector.broadcast %cst_72 : f32 to vector<8x64xf32>
    %149 = arith.maximumf %147, %148 : vector<8x64xf32>
    %c0_73 = arith.constant 0 : index
    %c0_74 = arith.constant 0 : index
    %c0_75 = arith.constant 0 : index
    %150 = vector.load %arg11[%c0_73, %c0_74, %c0_75] : memref<1x64x32xf32, #tpu.memory_space<vmem>>, vector<1x64x32xf32>
    %151 = vector.shape_cast %150 : vector<1x64x32xf32> to vector<64x32xf32>
    %cst_76 = arith.constant dense<0.000000e+00> : vector<8x32xf32>
    %152 = tpu.matmul %149, %151, %cst_76 {dimension_numbers = #tpu.dot_dimension_numbers<[1], [0], [0], [1], [0, 0, 1, 1], [], []>} : vector<8x64xf32>, vector<64x32xf32>, vector<8x32xf32> -> vector<8x32xf32>
    %153 = arith.addf %152, %144 : vector<8x32xf32>
    %cst_77 = arith.constant dense<0.000000e+00> : vector<8xf32>
    %154 = vector.multi_reduction <add>, %153, %cst_77 [1] : vector<8x32xf32> to vector<8xf32>
    %155 = vector.shape_cast %154 : vector<8xf32> to vector<8x1xf32>
    %cst_78 = arith.constant 3.200000e+01 : f32
    %156 = vector.broadcast %cst_78 : f32 to vector<8x1xf32>
    %157 = arith.divf %155, %156 : vector<8x1xf32>
    %158 = vector.broadcast %157 : vector<8x1xf32> to vector<8x32xf32>
    %159 = arith.subf %153, %158 : vector<8x32xf32>
    %160 = arith.mulf %159, %159 : vector<8x32xf32>
    %cst_79 = arith.constant dense<0.000000e+00> : vector<8xf32>
    %161 = vector.multi_reduction <add>, %160, %cst_79 [1] : vector<8x32xf32> to vector<8xf32>
    %162 = vector.shape_cast %161 : vector<8xf32> to vector<8x1xf32>
    %cst_80 = arith.constant 3.200000e+01 : f32
    %163 = vector.broadcast %cst_80 : f32 to vector<8x1xf32>
    %164 = arith.divf %162, %163 : vector<8x1xf32>
    %165 = vector.broadcast %157 : vector<8x1xf32> to vector<8x32xf32>
    %166 = arith.subf %153, %165 : vector<8x32xf32>
    %cst_81 = arith.constant 9.99999974E-6 : f32
    %167 = vector.broadcast %cst_81 : f32 to vector<8x1xf32>
    %168 = arith.addf %164, %167 : vector<8x1xf32>
    %169 = math.rsqrt %168 : vector<8x1xf32>
    %170 = vector.broadcast %169 : vector<8x1xf32> to vector<8x32xf32>
    %171 = arith.mulf %166, %170 : vector<8x32xf32>
    %c0_82 = arith.constant 0 : index
    %c0_83 = arith.constant 0 : index
    %c0_84 = arith.constant 0 : index
    %172 = vector.load %arg12[%c0_82, %c0_83, %c0_84] : memref<1x1x32xf32, #tpu.memory_space<vmem>>, vector<1x1x32xf32>
    %173 = vector.shape_cast %172 : vector<1x1x32xf32> to vector<1x32xf32>
    %174 = vector.broadcast %173 : vector<1x32xf32> to vector<8x32xf32>
    %175 = arith.mulf %171, %174 : vector<8x32xf32>
    %c0_85 = arith.constant 0 : index
    %c0_86 = arith.constant 0 : index
    %c0_87 = arith.constant 0 : index
    %176 = vector.load %arg13[%c0_85, %c0_86, %c0_87] : memref<1x1x32xf32, #tpu.memory_space<vmem>>, vector<1x1x32xf32>
    %177 = vector.shape_cast %176 : vector<1x1x32xf32> to vector<1x32xf32>
    %178 = vector.broadcast %177 : vector<1x32xf32> to vector<8x32xf32>
    %179 = arith.addf %175, %178 : vector<8x32xf32>
    %c1_i32 = arith.constant 1 : i32
    %180 = arith.cmpi ne, %arg1, %c1_i32 : i32
    %181 = arith.extui %180 : i1 to i32
    %c0_i32_88 = arith.constant 0 : i32
    %182 = arith.cmpi ne, %181, %c0_i32_88 : i32
    scf.if %182 {
      %c0_91 = arith.constant 0 : index
      %c0_92 = arith.constant 0 : index
      %186 = vector.load %arg16[%c0_91, %c0_92] : memref<8x32xf32, #tpu.memory_space<vmem>>, vector<8x32xf32>
      tpu.vector_store %arg16[%c0_91, %c0_92], %179 {strides = array<i32>} : memref<8x32xf32, #tpu.memory_space<vmem>>, vector<8x32xf32>,
    } else {
    }
    %c1_i32_89 = arith.constant 1 : i32
    %183 = arith.cmpi eq, %arg1, %c1_i32_89 : i32
    %184 = arith.extui %183 : i1 to i32
    %c0_i32_90 = arith.constant 0 : i32
    %185 = arith.cmpi ne, %184, %c0_i32_90 : i32
    scf.if %185 {
      %186 = vector.shape_cast %179 : vector<8x32xf32> to vector<1x8x32xf32>
      %c0_91 = arith.constant 0 : index
      %c0_92 = arith.constant 0 : index
      %c0_93 = arith.constant 0 : index
      %187 = vector.load %arg14[%c0_91, %c0_92, %c0_93] : memref<1x8x32xf32, #tpu.memory_space<vmem>>, vector<1x8x32xf32>
      tpu.vector_store %arg14[%c0_91, %c0_92, %c0_93], %186 {strides = array<i32>} : memref<1x8x32xf32, #tpu.memory_space<vmem>>, vector<1x8x32xf32>,
    } else {
    }
    return
  }
  func.func @transform_0(%arg0: i32, %arg1: i32) -> (i32, i32, i32) {
    %c0_i32 = arith.constant 0 : i32
    %c0_i32_0 = arith.constant 0 : i32
    %c0_i32_1 = arith.constant 0 : i32
    return %arg0, %c0_i32, %c0_i32_0 : i32, i32, i32
  }
  func.func @transform_1(%arg0: i32, %arg1: i32) -> (i32, i32, i32) {
    %c0_i32 = arith.constant 0 : i32
    %c0_i32_0 = arith.constant 0 : i32
    %c0_i32_1 = arith.constant 0 : i32
    return %arg0, %c0_i32, %c0_i32_0 : i32, i32, i32
  }
  func.func @transform_2(%arg0: i32, %arg1: i32) -> (i32, i32, i32) {
    %c0_i32 = arith.constant 0 : i32
    %c0_i32_0 = arith.constant 0 : i32
    %c0_i32_1 = arith.constant 0 : i32
    return %arg1, %c0_i32, %c0_i32_0 : i32, i32, i32
  }
  func.func @transform_3(%arg0: i32, %arg1: i32) -> (i32, i32, i32) {
    %c0_i32 = arith.constant 0 : i32
    %c0_i32_0 = arith.constant 0 : i32
    %c0_i32_1 = arith.constant 0 : i32
    return %arg1, %c0_i32, %c0_i32_0 : i32, i32, i32
  }
  func.func @transform_4(%arg0: i32, %arg1: i32) -> (i32, i32, i32) {
    %c0_i32 = arith.constant 0 : i32
    %c0_i32_0 = arith.constant 0 : i32
    %c0_i32_1 = arith.constant 0 : i32
    return %arg1, %c0_i32, %c0_i32_0 : i32, i32, i32
  }
  func.func @transform_5(%arg0: i32, %arg1: i32) -> (i32, i32, i32) {
    %c0_i32 = arith.constant 0 : i32
    %c0_i32_0 = arith.constant 0 : i32
    %c0_i32_1 = arith.constant 0 : i32
    return %arg1, %c0_i32, %c0_i32_0 : i32, i32, i32
  }
  func.func @transform_6(%arg0: i32, %arg1: i32) -> (i32, i32, i32) {
    %c0_i32 = arith.constant 0 : i32
    %c0_i32_0 = arith.constant 0 : i32
    %c0_i32_1 = arith.constant 0 : i32
    return %arg1, %c0_i32, %c0_i32_0 : i32, i32, i32
  }
  func.func @transform_7(%arg0: i32, %arg1: i32) -> (i32, i32, i32) {
    %c0_i32 = arith.constant 0 : i32
    %c0_i32_0 = arith.constant 0 : i32
    %c0_i32_1 = arith.constant 0 : i32
    return %arg1, %c0_i32, %c0_i32_0 : i32, i32, i32
  }
  func.func @transform_8(%arg0: i32, %arg1: i32) -> (i32, i32, i32) {
    %c0_i32 = arith.constant 0 : i32
    %c0_i32_0 = arith.constant 0 : i32
    %c0_i32_1 = arith.constant 0 : i32
    return %arg1, %c0_i32, %c0_i32_0 : i32, i32, i32
  }
  func.func @transform_9(%arg0: i32, %arg1: i32) -> (i32, i32, i32) {
    %c0_i32 = arith.constant 0 : i32
    %c0_i32_0 = arith.constant 0 : i32
    %c0_i32_1 = arith.constant 0 : i32
    return %arg1, %c0_i32, %c0_i32_0 : i32, i32, i32
  }
  func.func @transform_10(%arg0: i32, %arg1: i32) -> (i32, i32, i32) {
    %c0_i32 = arith.constant 0 : i32
    %c0_i32_0 = arith.constant 0 : i32
    %c0_i32_1 = arith.constant 0 : i32
    return %arg1, %c0_i32, %c0_i32_0 : i32, i32, i32
  }
  func.func @transform_11(%arg0: i32, %arg1: i32) -> (i32, i32, i32) {
    %c0_i32 = arith.constant 0 : i32
    %c0_i32_0 = arith.constant 0 : i32
    %c0_i32_1 = arith.constant 0 : i32
    return %arg1, %c0_i32, %c0_i32_0 : i32, i32, i32
  }
  func.func @transform_12(%arg0: i32, %arg1: i32) -> (i32, i32, i32) {
    %c0_i32 = arith.constant 0 : i32
    %c0_i32_0 = arith.constant 0 : i32
    %c0_i32_1 = arith.constant 0 : i32
    return %arg0, %c0_i32, %c0_i32_0 : i32, i32, i32
  }
  func.func @transform_13(%arg0: i32, %arg1: i32) -> (i32, i32, i32, i32, i32) {
    %c0_i32 = arith.constant 0 : i32
    %c0_i32_0 = arith.constant 0 : i32
    %c0_i32_1 = arith.constant 0 : i32
    %c0_i32_2 = arith.constant 0 : i32
    return %arg1, %c0_i32, %arg0, %c0_i32_0, %c0_i32_1 : i32, i32, i32, i32, i32
  }
}

</mosaic_0001>

<llo_original>
// kernel: tpu_custom_call.1
$region0: #{tpu_custom_call.1}
  #allocation0 [shape = 'u32[]', space=smem, size = 0x4, offset = 0x4, fixed_abs, tag = 'smem constant byte address 0x4 - core index']
  #allocation1 [shape = 'u32[144,128]{1,0:T(1,128)}', space=vmem, size = 0x12000, scoped, tag = 'internal scratch']
  #allocation2 [shape = 'f32[8,32]{1,0:T(8,128)}', space=vmem, size = 0x1000, scoped, tag = 'scratch operand']
  %s0 = inlined_call_operand.hbm [shape: f32[2,8,32], index: 0, kind: input, shape index: {}]
  %s1 = inlined_call_operand.vmem [shape: f32[2,1,8], index: 1, kind: input, shape index: {}]
  %s2 = inlined_call_operand.vmem [shape: f32[2,32,32], index: 2, kind: input, shape index: {}]
  %s3 = inlined_call_operand.vmem [shape: f32[2,32,32], index: 3, kind: input, shape index: {}]
  %s4 = inlined_call_operand.vmem [shape: f32[2,32,32], index: 4, kind: input, shape index: {}]
  %s5 = inlined_call_operand.hbm [shape: f32[2,32,32], index: 5, kind: input, shape index: {}]
  %s6 = inlined_call_operand.vmem [shape: f32[2,1,32], index: 6, kind: input, shape index: {}]
  %s7 = inlined_call_operand.vmem [shape: f32[2,1,32], index: 7, kind: input, shape index: {}]
  %s8 = inlined_call_operand.hbm [shape: f32[2,32,64], index: 8, kind: input, shape index: {}]
  %s9 = inlined_call_operand.vmem [shape: f32[2,64,32], index: 9, kind: input, shape index: {}]
  %s10 = inlined_call_operand.vmem [shape: f32[2,1,32], index: 10, kind: input, shape index: {}]
  %s11 = inlined_call_operand.vmem [shape: f32[2,1,32], index: 11, kind: input, shape index: {}]
  %s12 = inlined_call_operand.hbm [shape: f32[2,8,32], index: 12, kind: output, shape index: {0}]
  %s13 = inlined_call_operand.hbm [shape: f32[2,4,2,8,8], index: 13, kind: output, shape index: {1}]
  %14 = xla_tuple %s12, %s13
  %s15 = sld [smem:[#allocation0]]
  $region113: #{tpu_custom_call.1} parent=0
    _
  %s17 = ssub.s32 1, %s15
  %s18 = scalar_select 0, %s17, %s15
  $region1: #{tpu_custom_call.1} parent=0
    #allocation3 [shape = 'u8[8192]{0}', space=vmem, size = 0x2000, scoped, tag = 'input window, operand 0']
    #allocation4 [shape = 's32[2]{0}', space=sflag, size = 0x8, scoped, tag = 'scoped memory for tpu_custom_call.1']
    #allocation5 [shape = 's32[2]{0}', space=sflag, size = 0x8, scoped, tag = 'scoped memory for tpu_custom_call.1']
    #allocation6 [shape = 'u8[32768]{0}', space=vmem, size = 0x8000, scoped, tag = 'input window, operand 5']
    #allocation7 [shape = 's32[2]{0}', space=sflag, size = 0x8, scoped, tag = 'scoped memory for tpu_custom_call.1']
    #allocation8 [shape = 'u8[32768]{0}', space=vmem, size = 0x8000, scoped, tag = 'input window, operand 8']
    #allocation9 [shape = 'u8[8192]{0}', space=vmem, size = 0x2000, scoped, tag = 'output window, operand 0']
    #allocation10 [shape = 'u8[32768]{0}', space=vmem, size = 0x8000, scoped, tag = 'output window, operand 1']
    #allocation11 [shape = 's32[2]{0}', space=sflag, size = 0x8, scoped, tag = 'scoped memory for tpu_custom_call.1']
    %19 = vsyncpa [#allocation4], 0
    %s20 = scalar_lea.sflag [#allocation4], 1
    %21 = vsyncpa %s20, 0
    %22 = vsyncpa [#allocation7], 0
    %s23 = scalar_lea.sflag [#allocation7], 1
    %24 = vsyncpa %s23, 0
    %25 = vsyncpa [#allocation5], 0
    %s26 = scalar_lea.sflag [#allocation5], 1
    %27 = vsyncpa %s26, 0
    %28 = vsyncpa [#allocation11], 0
    %s29 = scalar_lea.sflag [#allocation11], 1
    %30 = vsyncpa %s29, 0
    loop: start=0, step=1, limit=6
    $region2: #{tpu_custom_call.1} parent=1 // loop_pre_header
      _
    $region3: #{tpu_custom_call.1} parent=1 // loop_header
      %s32 = sphi 0, %s36
      %p33 = scmp.ge.s32.totalorder %s32, 6
      %s39 = sphi 0, %s51
      %s40 = sphi 0, %s47
      %s41 = sphi 0, %s39
      %s42 = sphi 0, %s40
      %s43 = sphi 0, %s41
      %s44 = sphi 0, %s42
      %s54 = sphi 0, %s56
      %s57 = sphi 0, %s54
      %s58 = sphi 0, %s57
      %s74 = sphi 0, %s58
      %s80 = sphi 0, %s82
      %s83 = sphi 0, %s80
      %s84 = sphi 0, %s83
      %s100 = sphi 0, %s84
      %s106 = sphi 0, %s108
      %s109 = sphi 0, %s106
      %s110 = sphi 0, %s109
      %s126 = sphi 0, %s110
      %s132 = sphi 0, %s134
      %s135 = sphi 0, %s132
      %s136 = sphi 0, %s135
      %s152 = sphi 0, %s136
      %s158 = sphi 0, %s160
      %s161 = sphi 0, %s158
      %s162 = sphi 0, %s161
      %s178 = sphi 0, %s162
      %s184 = sphi 0, %s186
      %s187 = sphi 0, %s184
      %s188 = sphi 0, %s187
      %s204 = sphi 0, %s188
      %s210 = sphi 0, %s212
      %s213 = sphi 0, %s210
      %s214 = sphi 0, %s213
      %s230 = sphi 0, %s214
      %s236 = sphi 0, %s238
      %s239 = sphi 0, %s236
      %s240 = sphi 0, %s239
      %s256 = sphi 0, %s240
      %s262 = sphi 0, %s264
      %s265 = sphi 0, %s262
      %s266 = sphi 0, %s265
      %s282 = sphi 0, %s266
      %s288 = sphi 0, %s290
      %s291 = sphi 0, %s288
      %s292 = sphi 0, %s291
      %s308 = sphi 0, %s292
      %s314 = sphi 0, %s316
      %s317 = sphi 0, %s314
      %s318 = sphi 0, %s317
      %s334 = sphi 0, %s318
      %s340 = sphi 0, %s342
      %s343 = sphi 0, %s340
      %s344 = sphi 0, %s343
      %s360 = sphi 0, %s344
      %s366 = sphi 0, %s368
      %s369 = sphi 0, %s366
      %s370 = sphi 0, %s369
      %s386 = sphi 0, %s370
      %s394 = sphi 0, %s396
      %s397 = sphi 0, %s394
      %s398 = sphi 0, %s397
      %s414 = sphi 0, %s398
    $region4: #{tpu_custom_call.1} parent=1 // loop_header_branch
      %35 = sbr.rel (%p33) target = $region8
    $region5: #{tpu_custom_call.1} parent=1 // loop_body
      %s37 = ssub.s32 %s32, 1
      %s38 = ssub.s32 %s32, 2
      %s45 = sadd.s32 1, %s40
      %p46 = scmp.ge.s32.totalorder %s45, 2
      %s47 = scalar_select %p46, 0, %s45
      %s48 = sadd.s32 1, %s39
      %s49 = scalar_select %p46, %s48, %s39
      %p50 = scmp.ge.s32.totalorder %s49, 2
      %s51 = scalar_select %p50, 0, %s49
      %s52 = ssub.s32 %s39, %s51
      %p53 = scmp.eq.s32.totalorder %s52, 0
      %s55 = sadd.s32 %s54, 1
      %s56 = scalar_select %p53, %s54, %s55
      %p59 = pneg %p53
      %p60 = scmp.eq.s32.totalorder %s32, 3
      %p61 = por %p59, %p60
      %p62 = scmp.ne.s32.totalorder %s54, %s57
      %p63 = scmp.eq.s32.totalorder %s32, 0
      %p64 = por %p62, %p63
      %p65 = scmp.ne.s32.totalorder %s54, %s57
      %p66 = scmp.eq.s32.totalorder %s37, 3
      %p67 = por %p65, %p66
      %p68 = scmp.ne.s32.totalorder %s57, %s58
      %p69 = scmp.eq.s32.totalorder %s37, 0
      %p70 = por %p68, %p69
      %p71 = scmp.ne.s32.totalorder %s57, %s58
      %p72 = scmp.eq.s32.totalorder %s38, 3
      %p73 = por %p71, %p72
      %p75 = scmp.ne.s32.totalorder %s58, %s74
      %p76 = scmp.eq.s32.totalorder %s38, 0
      %p77 = por %p75, %p76
      %s78 = ssub.s32 %s39, %s51
      %p79 = scmp.eq.s32.totalorder %s78, 0
      %s81 = sadd.s32 %s80, 1
      %s82 = scalar_select %p79, %s80, %s81
      %p85 = pneg %p79
      %p86 = scmp.eq.s32.totalorder %s32, 3
      %p87 = por %p85, %p86
      %p88 = scmp.ne.s32.totalorder %s80, %s83
      %p89 = scmp.eq.s32.totalorder %s32, 0
      %p90 = por %p88, %p89
      %p91 = scmp.ne.s32.totalorder %s80, %s83
      %p92 = scmp.eq.s32.totalorder %s37, 3
      %p93 = por %p91, %p92
      %p94 = scmp.ne.s32.totalorder %s83, %s84
      %p95 = scmp.eq.s32.totalorder %s37, 0
      %p96 = por %p94, %p95
      %p97 = scmp.ne.s32.totalorder %s83, %s84
      %p98 = scmp.eq.s32.totalorder %s38, 3
      %p99 = por %p97, %p98
      %p101 = scmp.ne.s32.totalorder %s84, %s100
      %p102 = scmp.eq.s32.totalorder %s38, 0
      %p103 = por %p101, %p102
      %s104 = ssub.s32 %s40, %s47
      %p105 = scmp.eq.s32.totalorder %s104, 0
      %s107 = sadd.s32 %s106, 1
      %s108 = scalar_select %p105, %s106, %s107
      %p111 = pneg %p105
      %p112 = scmp.eq.s32.totalorder %s32, 3
      %p113 = por %p111, %p112
      %p114 = scmp.ne.s32.totalorder %s106, %s109
      %p115 = scmp.eq.s32.totalorder %s32, 0
      %p116 = por %p114, %p115
      %p117 = scmp.ne.s32.totalorder %s106, %s109
      %p118 = scmp.eq.s32.totalorder %s37, 3
      %p119 = por %p117, %p118
      %p120 = scmp.ne.s32.totalorder %s109, %s110
      %p121 = scmp.eq.s32.totalorder %s37, 0
      %p122 = por %p120, %p121
      %p123 = scmp.ne.s32.totalorder %s109, %s110
      %p124 = scmp.eq.s32.totalorder %s38, 3
      %p125 = por %p123, %p124
      %p127 = scmp.ne.s32.totalorder %s110, %s126
      %p128 = scmp.eq.s32.totalorder %s38, 0
      %p129 = por %p127, %p128
      %s130 = ssub.s32 %s40, %s47
      %p131 = scmp.eq.s32.totalorder %s130, 0
      %s133 = sadd.s32 %s132, 1
      %s134 = scalar_select %p131, %s132, %s133
      %p137 = pneg %p131
      %p138 = scmp.eq.s32.totalorder %s32, 3
      %p139 = por %p137, %p138
      %p140 = scmp.ne.s32.totalorder %s132, %s135
      %p141 = scmp.eq.s32.totalorder %s32, 0
      %p142 = por %p140, %p141
      %p143 = scmp.ne.s32.totalorder %s132, %s135
      %p144 = scmp.eq.s32.totalorder %s37, 3
      %p145 = por %p143, %p144
      %p146 = scmp.ne.s32.totalorder %s135, %s136
      %p147 = scmp.eq.s32.totalorder %s37, 0
      %p148 = por %p146, %p147
      %p149 = scmp.ne.s32.totalorder %s135, %s136
      %p150 = scmp.eq.s32.totalorder %s38, 3
      %p151 = por %p149, %p150
      %p153 = scmp.ne.s32.totalorder %s136, %s152
      %p154 = scmp.eq.s32.totalorder %s38, 0
      %p155 = por %p153, %p154
      %s156 = ssub.s32 %s40, %s47
      %p157 = scmp.eq.s32.totalorder %s156, 0
      %s159 = sadd.s32 %s158, 1
      %s160 = scalar_select %p157, %s158, %s159
      %p163 = pneg %p157
      %p164 = scmp.eq.s32.totalorder %s32, 3
      %p165 = por %p163, %p164
      %p166 = scmp.ne.s32.totalorder %s158, %s161
      %p167 = scmp.eq.s32.totalorder %s32, 0
      %p168 = por %p166, %p167
      %p169 = scmp.ne.s32.totalorder %s158, %s161
      %p170 = scmp.eq.s32.totalorder %s37, 3
      %p171 = por %p169, %p170
      %p172 = scmp.ne.s32.totalorder %s161, %s162
      %p173 = scmp.eq.s32.totalorder %s37, 0
      %p174 = por %p172, %p173
      %p175 = scmp.ne.s32.totalorder %s161, %s162
      %p176 = scmp.eq.s32.totalorder %s38, 3
      %p177 = por %p175, %p176
      %p179 = scmp.ne.s32.totalorder %s162, %s178
      %p180 = scmp.eq.s32.totalorder %s38, 0
      %p181 = por %p179, %p180
      %s182 = ssub.s32 %s40, %s47
      %p183 = scmp.eq.s32.totalorder %s182, 0
      %s185 = sadd.s32 %s184, 1
      %s186 = scalar_select %p183, %s184, %s185
      %p189 = pneg %p183
      %p190 = scmp.eq.s32.totalorder %s32, 3
      %p191 = por %p189, %p190
      %p192 = scmp.ne.s32.totalorder %s184, %s187
      %p193 = scmp.eq.s32.totalorder %s32, 0
      %p194 = por %p192, %p193
      %p195 = scmp.ne.s32.totalorder %s184, %s187
      %p196 = scmp.eq.s32.totalorder %s37, 3
      %p197 = por %p195, %p196
      %p198 = scmp.ne.s32.totalorder %s187, %s188
      %p199 = scmp.eq.s32.totalorder %s37, 0
      %p200 = por %p198, %p199
      %p201 = scmp.ne.s32.totalorder %s187, %s188
      %p202 = scmp.eq.s32.totalorder %s38, 3
      %p203 = por %p201, %p202
      %p205 = scmp.ne.s32.totalorder %s188, %s204
      %p206 = scmp.eq.s32.totalorder %s38, 0
      %p207 = por %p205, %p206
      %s208 = ssub.s32 %s40, %s47
      %p209 = scmp.eq.s32.totalorder %s208, 0
      %s211 = sadd.s32 %s210, 1
      %s212 = scalar_select %p209, %s210, %s211
      %p215 = pneg %p209
      %p216 = scmp.eq.s32.totalorder %s32, 3
      %p217 = por %p215, %p216
      %p218 = scmp.ne.s32.totalorder %s210, %s213
      %p219 = scmp.eq.s32.totalorder %s32, 0
      %p220 = por %p218, %p219
      %p221 = scmp.ne.s32.totalorder %s210, %s213
      %p222 = scmp.eq.s32.totalorder %s37, 3
      %p223 = por %p221, %p222
      %p224 = scmp.ne.s32.totalorder %s213, %s214
      %p225 = scmp.eq.s32.totalorder %s37, 0
      %p226 = por %p224, %p225
      %p227 = scmp.ne.s32.totalorder %s213, %s214
      %p228 = scmp.eq.s32.totalorder %s38, 3
      %p229 = por %p227, %p228
      %p231 = scmp.ne.s32.totalorder %s214, %s230
      %p232 = scmp.eq.s32.totalorder %s38, 0
      %p233 = por %p231, %p232
      %s234 = ssub.s32 %s40, %s47
      %p235 = scmp.eq.s32.totalorder %s234, 0
      %s237 = sadd.s32 %s236, 1
      %s238 = scalar_select %p235, %s236, %s237
      %p241 = pneg %p235
      %p242 = scmp.eq.s32.totalorder %s32, 3
      %p243 = por %p241, %p242
      %p244 = scmp.ne.s32.totalorder %s236, %s239
      %p245 = scmp.eq.s32.totalorder %s32, 0
      %p246 = por %p244, %p245
      %p247 = scmp.ne.s32.totalorder %s236, %s239
      %p248 = scmp.eq.s32.totalorder %s37, 3
      %p249 = por %p247, %p248
      %p250 = scmp.ne.s32.totalorder %s239, %s240
      %p251 = scmp.eq.s32.totalorder %s37, 0
      %p252 = por %p250, %p251
      %p253 = scmp.ne.s32.totalorder %s239, %s240
      %p254 = scmp.eq.s32.totalorder %s38, 3
      %p255 = por %p253, %p254
      %p257 = scmp.ne.s32.totalorder %s240, %s256
      %p258 = scmp.eq.s32.totalorder %s38, 0
      %p259 = por %p257, %p258
      %s260 = ssub.s32 %s40, %s47
      %p261 = scmp.eq.s32.totalorder %s260, 0
      %s263 = sadd.s32 %s262, 1
      %s264 = scalar_select %p261, %s262, %s263
      %p267 = pneg %p261
      %p268 = scmp.eq.s32.totalorder %s32, 3
      %p269 = por %p267, %p268
      %p270 = scmp.ne.s32.totalorder %s262, %s265
      %p271 = scmp.eq.s32.totalorder %s32, 0
      %p272 = por %p270, %p271
      %p273 = scmp.ne.s32.totalorder %s262, %s265
      %p274 = scmp.eq.s32.totalorder %s37, 3
      %p275 = por %p273, %p274
      %p276 = scmp.ne.s32.totalorder %s265, %s266
      %p277 = scmp.eq.s32.totalorder %s37, 0
      %p278 = por %p276, %p277
      %p279 = scmp.ne.s32.totalorder %s265, %s266
      %p280 = scmp.eq.s32.totalorder %s38, 3
      %p281 = por %p279, %p280
      %p283 = scmp.ne.s32.totalorder %s266, %s282
      %p284 = scmp.eq.s32.totalorder %s38, 0
      %p285 = por %p283, %p284
      %s286 = ssub.s32 %s40, %s47
      %p287 = scmp.eq.s32.totalorder %s286, 0
      %s289 = sadd.s32 %s288, 1
      %s290 = scalar_select %p287, %s288, %s289
      %p293 = pneg %p287
      %p294 = scmp.eq.s32.totalorder %s32, 3
      %p295 = por %p293, %p294
      %p296 = scmp.ne.s32.totalorder %s288, %s291
      %p297 = scmp.eq.s32.totalorder %s32, 0
      %p298 = por %p296, %p297
      %p299 = scmp.ne.s32.totalorder %s288, %s291
      %p300 = scmp.eq.s32.totalorder %s37, 3
      %p301 = por %p299, %p300
      %p302 = scmp.ne.s32.totalorder %s291, %s292
      %p303 = scmp.eq.s32.totalorder %s37, 0
      %p304 = por %p302, %p303
      %p305 = scmp.ne.s32.totalorder %s291, %s292
      %p306 = scmp.eq.s32.totalorder %s38, 3
      %p307 = por %p305, %p306
      %p309 = scmp.ne.s32.totalorder %s292, %s308
      %p310 = scmp.eq.s32.totalorder %s38, 0
      %p311 = por %p309, %p310
      %s312 = ssub.s32 %s40, %s47
      %p313 = scmp.eq.s32.totalorder %s312, 0
      %s315 = sadd.s32 %s314, 1
      %s316 = scalar_select %p313, %s314, %s315
      %p319 = pneg %p313
      %p320 = scmp.eq.s32.totalorder %s32, 3
      %p321 = por %p319, %p320
      %p322 = scmp.ne.s32.totalorder %s314, %s317
      %p323 = scmp.eq.s32.totalorder %s32, 0
      %p324 = por %p322, %p323
      %p325 = scmp.ne.s32.totalorder %s314, %s317
      %p326 = scmp.eq.s32.totalorder %s37, 3
      %p327 = por %p325, %p326
      %p328 = scmp.ne.s32.totalorder %s317, %s318
      %p329 = scmp.eq.s32.totalorder %s37, 0
      %p330 = por %p328, %p329
      %p331 = scmp.ne.s32.totalorder %s317, %s318
      %p332 = scmp.eq.s32.totalorder %s38, 3
      %p333 = por %p331, %p332
      %p335 = scmp.ne.s32.totalorder %s318, %s334
      %p336 = scmp.eq.s32.totalorder %s38, 0
      %p337 = por %p335, %p336
      %s338 = ssub.s32 %s40, %s47
      %p339 = scmp.eq.s32.totalorder %s338, 0
      %s341 = sadd.s32 %s340, 1
      %s342 = scalar_select %p339, %s340, %s341
      %p345 = pneg %p339
      %p346 = scmp.eq.s32.totalorder %s32, 3
      %p347 = por %p345, %p346
      %p348 = scmp.ne.s32.totalorder %s340, %s343
      %p349 = scmp.eq.s32.totalorder %s32, 0
      %p350 = por %p348, %p349
      %p351 = scmp.ne.s32.totalorder %s340, %s343
      %p352 = scmp.eq.s32.totalorder %s37, 3
      %p353 = por %p351, %p352
      %p354 = scmp.ne.s32.totalorder %s343, %s344
      %p355 = scmp.eq.s32.totalorder %s37, 0
      %p356 = por %p354, %p355
      %p357 = scmp.ne.s32.totalorder %s343, %s344
      %p358 = scmp.eq.s32.totalorder %s38, 3
      %p359 = por %p357, %p358
      %p361 = scmp.ne.s32.totalorder %s344, %s360
      %p362 = scmp.eq.s32.totalorder %s38, 0
      %p363 = por %p361, %p362
      %s364 = ssub.s32 %s39, %s51
      %p365 = scmp.eq.s32.totalorder %s364, 0
      %s367 = sadd.s32 %s366, 1
      %s368 = scalar_select %p365, %s366, %s367
      %p371 = pneg %p365
      %p372 = scmp.eq.s32.totalorder %s32, 3
      %p373 = por %p371, %p372
      %p374 = scmp.ne.s32.totalorder %s366, %s369
      %p375 = scmp.eq.s32.totalorder %s32, 0
      %p376 = por %p374, %p375
      %p377 = scmp.ne.s32.totalorder %s366, %s369
      %p378 = scmp.eq.s32.totalorder %s37, 3
      %p379 = por %p377, %p378
      %p380 = scmp.ne.s32.totalorder %s369, %s370
      %p381 = scmp.eq.s32.totalorder %s37, 0
      %p382 = por %p380, %p381
      %p383 = scmp.ne.s32.totalorder %s369, %s370
      %p384 = scmp.eq.s32.totalorder %s38, 3
      %p385 = por %p383, %p384
      %p387 = scmp.ne.s32.totalorder %s370, %s386
      %p388 = scmp.eq.s32.totalorder %s38, 0
      %p389 = por %p387, %p388
      %s390 = ssub.s32 %s40, %s47
      %s391 = ssub.s32 %s39, %s51
      %s392 = sor.u32 %s390, %s391
      %p393 = scmp.eq.s32.totalorder %s392, 0
      %s395 = sadd.s32 %s394, 1
      %s396 = scalar_select %p393, %s394, %s395
      %p399 = pneg %p393
      %p400 = scmp.eq.s32.totalorder %s32, 3
      %p401 = por %p399, %p400
      %p402 = scmp.ne.s32.totalorder %s394, %s397
      %p403 = scmp.eq.s32.totalorder %s32, 0
      %p404 = por %p402, %p403
      %p405 = scmp.ne.s32.totalorder %s394, %s397
      %p406 = scmp.eq.s32.totalorder %s37, 3
      %p407 = por %p405, %p406
      %p408 = scmp.ne.s32.totalorder %s397, %s398
      %p409 = scmp.eq.s32.totalorder %s37, 0
      %p410 = por %p408, %p409
      %p411 = scmp.ne.s32.totalorder %s397, %s398
      %p412 = scmp.eq.s32.totalorder %s38, 3
      %p413 = por %p411, %p412
      %p415 = scmp.ne.s32.totalorder %s398, %s414
      %p416 = scmp.eq.s32.totalorder %s38, 0
      %p417 = por %p415, %p416
      %p418 = scmp.le.s32.totalorder 1, %s32
      %p419 = scmp.lt.s32.totalorder %s32, 5
      %p420 = pnand %p418, %p419
      %p421 = pneg %p420
      // Predicated region
      $region9: #{tpu_custom_call.1} parent=5 // pred_check
        _
      $region10: #{tpu_custom_call.1} parent=5 // pred_check_branch
        %423 = sbr.rel (%p420) target = $region12
      $region11: #{tpu_custom_call.1} parent=5 // pred_region
        %s424 = ssub.s32 %s32, 1
      $region12: #{tpu_custom_call.1} parent=5 // pred_fallthru
        _
      %p425 = scmp.lt.s32.totalorder %s32, 4
      // Predicated region
      $region13: #{tpu_custom_call.1} parent=5 // pred_check
        %p426 = pneg %p425
      $region14: #{tpu_custom_call.1} parent=5 // pred_check_branch
        %428 = sbr.rel (%p426) target = $region16
      $region15: #{tpu_custom_call.1} parent=5 // pred_region
        // Predicated region
        $region17: #{tpu_custom_call.1} parent=15 // pred_check
          %p429 = pneg %p64
        $region18: #{tpu_custom_call.1} parent=15 // pred_check_branch
          %431 = sbr.rel (%p429) target = $region20
        $region19: #{tpu_custom_call.1} parent=15 // pred_region
          %s432 = sand.u32 %s54, 1
          %s433 = scalar_lea.sflag [#allocation4], %s432
          %s434 = sand.u32 %s54, 1
          %s435 = smul.addr %s434, 8
          %s436 = scalar_lea.vmem [#allocation3], %s435
          %s438 = ssub.s32 128, 128
          %439 = vsyncadd %s433, %s438
          %s440 = smul.addr %s39, 128
          %s441 = scalar_lea.hbm %s0, %s440
          %s443 = sshll.u32 %s436, 4
          %s444 = int_to_ptr.vmem [resolvable:$true] %s443
          %446 = dma.hbm_to_vmem [thread:$0]  %s441, 128, %s444, %s433
        $region20: #{tpu_custom_call.1} parent=15 // pred_fallthru
          _
        // Predicated region
        $region21: #{tpu_custom_call.1} parent=15 // pred_check
          %p447 = pneg %p90
        $region22: #{tpu_custom_call.1} parent=15 // pred_check_branch
          %449 = sbr.rel (%p447) target = $region24
        $region23: #{tpu_custom_call.1} parent=15 // pred_region
          %p450 = scmp.lt.s32.totalorder %s39, 1
          %s451 = scalar_select %p450, %s39, 1
          %s452 = scalar_lea.vmem %s1, %s451
        $region24: #{tpu_custom_call.1} parent=15 // pred_fallthru
          _
        // Predicated region
        $region25: #{tpu_custom_call.1} parent=15 // pred_check
          %p453 = pneg %p116
        $region26: #{tpu_custom_call.1} parent=15 // pred_check_branch
          %455 = sbr.rel (%p453) target = $region28
        $region27: #{tpu_custom_call.1} parent=15 // pred_region
          %p456 = scmp.lt.s32.totalorder %s40, 1
          %s457 = scalar_select %p456, %s40, 1
          %s458 = smul.addr %s457, 4
          %s459 = smul.addr %s458, 8
          %s460 = scalar_lea.vmem %s2, %s459
        $region28: #{tpu_custom_call.1} parent=15 // pred_fallthru
          _
        // Predicated region
        $region29: #{tpu_custom_call.1} parent=15 // pred_check
          %p461 = pneg %p142
        $region30: #{tpu_custom_call.1} parent=15 // pred_check_branch
          %463 = sbr.rel (%p461) target = $region32
        $region31: #{tpu_custom_call.1} parent=15 // pred_region
          %p464 = scmp.lt.s32.totalorder %s40, 1
          %s465 = scalar_select %p464, %s40, 1
          %s466 = smul.addr %s465, 4
          %s467 = smul.addr %s466, 8
          %s468 = scalar_lea.vmem %s3, %s467
        $region32: #{tpu_custom_call.1} parent=15 // pred_fallthru
          _
        // Predicated region
        $region33: #{tpu_custom_call.1} parent=15 // pred_check
          %p469 = pneg %p168
        $region34: #{tpu_custom_call.1} parent=15 // pred_check_branch
          %471 = sbr.rel (%p469) target = $region36
        $region35: #{tpu_custom_call.1} parent=15 // pred_region
          %p472 = scmp.lt.s32.totalorder %s40, 1
          %s473 = scalar_select %p472, %s40, 1
          %s474 = smul.addr %s473, 4
          %s475 = smul.addr %s474, 8
          %s476 = scalar_lea.vmem %s4, %s475
        $region36: #{tpu_custom_call.1} parent=15 // pred_fallthru
          _
        // Predicated region
        $region37: #{tpu_custom_call.1} parent=15 // pred_check
          %p477 = pneg %p194
        $region38: #{tpu_custom_call.1} parent=15 // pred_check_branch
          %479 = sbr.rel (%p477) target = $region40
        $region39: #{tpu_custom_call.1} parent=15 // pred_region
          %s480 = sand.u32 %s32, 1
          %s481 = scalar_lea.sflag [#allocation7], %s480
          %s482 = sand.u32 %s184, 1
          %s483 = smul.addr %s482, 32
          %s484 = scalar_lea.vmem [#allocation6], %s483
          %s486 = ssub.s32 512, 512
          %487 = vsyncadd %s481, %s486
          %s488 = smul.addr %s40, 4
          %s489 = smul.addr %s488, 128
          %s490 = scalar_lea.hbm %s5, %s489
          %s491 = sshll.u32 %s484, 4
          %s492 = int_to_ptr.vmem [resolvable:$true] %s491
          %497 = dma.hbm_to_vmem [thread:$0]  %s490, 512, %s492, %s481, 128, 128, 8
        $region40: #{tpu_custom_call.1} parent=15 // pred_fallthru
          _
        // Predicated region
        $region41: #{tpu_custom_call.1} parent=15 // pred_check
          %p498 = pneg %p220
        $region42: #{tpu_custom_call.1} parent=15 // pred_check_branch
          %500 = sbr.rel (%p498) target = $region44
        $region43: #{tpu_custom_call.1} parent=15 // pred_region
          %p501 = scmp.lt.s32.totalorder %s40, 1
          %s502 = scalar_select %p501, %s40, 1
          %s503 = scalar_lea.vmem %s6, %s502
        $region44: #{tpu_custom_call.1} parent=15 // pred_fallthru
          _
        // Predicated region
        $region45: #{tpu_custom_call.1} parent=15 // pred_check
          %p504 = pneg %p246
        $region46: #{tpu_custom_call.1} parent=15 // pred_check_branch
          %506 = sbr.rel (%p504) target = $region48
        $region47: #{tpu_custom_call.1} parent=15 // pred_region
          %p507 = scmp.lt.s32.totalorder %s40, 1
          %s508 = scalar_select %p507, %s40, 1
          %s509 = scalar_lea.vmem %s7, %s508
        $region48: #{tpu_custom_call.1} parent=15 // pred_fallthru
          _
        // Predicated region
        $region49: #{tpu_custom_call.1} parent=15 // pred_check
          %p510 = pneg %p272
        $region50: #{tpu_custom_call.1} parent=15 // pred_check_branch
          %512 = sbr.rel (%p510) target = $region52
        $region51: #{tpu_custom_call.1} parent=15 // pred_region
          %s513 = sand.u32 %s32, 1
          %s514 = scalar_lea.sflag [#allocation7], %s513
          %s515 = sand.u32 %s262, 1
          %s516 = smul.addr %s515, 32
          %s517 = scalar_lea.vmem [#allocation8], %s516
          %s519 = ssub.s32 512, 512
          %520 = vsyncadd %s514, %s519
          %s521 = smul.addr %s40, 4
          %s522 = smul.addr %s521, 128
          %s523 = scalar_lea.hbm %s8, %s522
          %s524 = sshll.u32 %s517, 4
          %s525 = int_to_ptr.vmem [resolvable:$true] %s524
          %530 = dma.hbm_to_vmem [thread:$0]  %s523, 512, %s525, %s514, 128, 128, 8
        $region52: #{tpu_custom_call.1} parent=15 // pred_fallthru
          _
        // Predicated region
        $region53: #{tpu_custom_call.1} parent=15 // pred_check
          %p531 = pneg %p298
        $region54: #{tpu_custom_call.1} parent=15 // pred_check_branch
          %533 = sbr.rel (%p531) target = $region56
        $region55: #{tpu_custom_call.1} parent=15 // pred_region
          %p534 = scmp.lt.s32.totalorder %s40, 1
          %s535 = scalar_select %p534, %s40, 1
          %s536 = smul.addr %s535, 8
          %s537 = smul.addr %s536, 8
          %s538 = scalar_lea.vmem %s9, %s537
        $region56: #{tpu_custom_call.1} parent=15 // pred_fallthru
          _
        // Predicated region
        $region57: #{tpu_custom_call.1} parent=15 // pred_check
          %p539 = pneg %p324
        $region58: #{tpu_custom_call.1} parent=15 // pred_check_branch
          %541 = sbr.rel (%p539) target = $region60
        $region59: #{tpu_custom_call.1} parent=15 // pred_region
          %p542 = scmp.lt.s32.totalorder %s40, 1
          %s543 = scalar_select %p542, %s40, 1
          %s544 = scalar_lea.vmem %s10, %s543
        $region60: #{tpu_custom_call.1} parent=15 // pred_fallthru
          _
        // Predicated region
        $region61: #{tpu_custom_call.1} parent=15 // pred_check
          %p545 = pneg %p350
        $region62: #{tpu_custom_call.1} parent=15 // pred_check_branch
          %547 = sbr.rel (%p545) target = $region64
        $region63: #{tpu_custom_call.1} parent=15 // pred_region
          %p548 = scmp.lt.s32.totalorder %s40, 1
          %s549 = scalar_select %p548, %s40, 1
          %s550 = scalar_lea.vmem %s11, %s549
        $region64: #{tpu_custom_call.1} parent=15 // pred_fallthru
          _
      $region16: #{tpu_custom_call.1} parent=5 // pred_fallthru
        _
      %p551 = scmp.le.s32.totalorder 1, %s32
      %p552 = scmp.lt.s32.totalorder %s32, 5
      %p553 = pnand %p551, %p552
      %p554 = pneg %p553
      // Predicated region
      $region65: #{tpu_custom_call.1} parent=5 // pred_check
        _
      $region66: #{tpu_custom_call.1} parent=5 // pred_check_branch
        %556 = sbr.rel (%p553) target = $region68
      $region67: #{tpu_custom_call.1} parent=5 // pred_region
        %s557 = ssub.s32 %s32, 1
        %s558 = sand.u32 %s57, 1
        %s559 = scalar_lea.sflag [#allocation4], %s558
        %s560 = sand.u32 %s57, 1
        %s561 = smul.addr %s560, 8
        %s562 = scalar_lea.vmem [#allocation3], %s561
        // Predicated region
        $region69: #{tpu_custom_call.1} parent=67 // pred_check
          %p563 = pneg %p70
        $region70: #{tpu_custom_call.1} parent=67 // pred_check_branch
          %565 = sbr.rel (%p563) target = $region72
        $region71: #{tpu_custom_call.1} parent=67 // pred_region
          %566 = dma.done %s559, 128
        $region72: #{tpu_custom_call.1} parent=67 // pred_fallthru
          _
        %s567 = sand.u32 %s37, 1
        %s568 = scalar_lea.sflag [#allocation7], %s567
        %s569 = sand.u32 %s187, 1
        %s570 = smul.addr %s569, 32
        %s571 = scalar_lea.vmem [#allocation6], %s570
        // Predicated region
        $region73: #{tpu_custom_call.1} parent=67 // pred_check
          %p572 = pneg %p200
        $region74: #{tpu_custom_call.1} parent=67 // pred_check_branch
          %574 = sbr.rel (%p572) target = $region76
        $region75: #{tpu_custom_call.1} parent=67 // pred_region
          %575 = dma.done %s568, 512
        $region76: #{tpu_custom_call.1} parent=67 // pred_fallthru
          _
        %s576 = sand.u32 %s37, 1
        %s577 = scalar_lea.sflag [#allocation7], %s576
        %s578 = sand.u32 %s265, 1
        %s579 = smul.addr %s578, 32
        %s580 = scalar_lea.vmem [#allocation8], %s579
        // Predicated region
        $region77: #{tpu_custom_call.1} parent=67 // pred_check
          %p581 = pneg %p278
        $region78: #{tpu_custom_call.1} parent=67 // pred_check_branch
          %583 = sbr.rel (%p581) target = $region80
        $region79: #{tpu_custom_call.1} parent=67 // pred_region
          %584 = dma.done %s577, 512
        $region80: #{tpu_custom_call.1} parent=67 // pred_fallthru
          _
        %s585 = sand.u32 %s57, 1
        %s586 = scalar_lea.sflag [#allocation4], %s585
        %s587 = sand.u32 %s57, 1
        %s588 = smul.addr %s587, 8
        %s589 = scalar_lea.vmem [#allocation3], %s588
        %p590 = pneg %p70
        %p591 = pneg %p67
        %p592 = scmp.lt.s32.totalorder %s41, 1
        %s593 = scalar_select %p592, %s41, 1
        %s594 = scalar_lea.vmem %s1, %s593
        %p595 = pneg %p96
        %p596 = pneg %p93
        %p597 = scmp.lt.s32.totalorder %s42, 1
        %s598 = scalar_select %p597, %s42, 1
        %s599 = smul.addr %s598, 4
        %s600 = smul.addr %s599, 8
        %s601 = scalar_lea.vmem %s2, %s600
        %p602 = pneg %p122
        %p603 = pneg %p119
        %p604 = scmp.lt.s32.totalorder %s42, 1
        %s605 = scalar_select %p604, %s42, 1
        %s606 = smul.addr %s605, 4
        %s607 = smul.addr %s606, 8
        %s608 = scalar_lea.vmem %s3, %s607
        %p609 = pneg %p148
        %p610 = pneg %p145
        %p611 = scmp.lt.s32.totalorder %s42, 1
        %s612 = scalar_select %p611, %s42, 1
        %s613 = smul.addr %s612, 4
        %s614 = smul.addr %s613, 8
        %s615 = scalar_lea.vmem %s4, %s614
        %p616 = pneg %p174
        %p617 = pneg %p171
        %s618 = sand.u32 %s37, 1
        %s619 = scalar_lea.sflag [#allocation7], %s618
        %s620 = sand.u32 %s187, 1
        %s621 = smul.addr %s620, 32
        %s622 = scalar_lea.vmem [#allocation6], %s621
        %p623 = pneg %p200
        %p624 = pneg %p197
        %p625 = scmp.lt.s32.totalorder %s42, 1
        %s626 = scalar_select %p625, %s42, 1
        %s627 = scalar_lea.vmem %s6, %s626
        %p628 = pneg %p226
        %p629 = pneg %p223
        %p630 = scmp.lt.s32.totalorder %s42, 1
        %s631 = scalar_select %p630, %s42, 1
        %s632 = scalar_lea.vmem %s7, %s631
        %p633 = pneg %p252
        %p634 = pneg %p249
        %s635 = sand.u32 %s37, 1
        %s636 = scalar_lea.sflag [#allocation7], %s635
        %s637 = sand.u32 %s265, 1
        %s638 = smul.addr %s637, 32
        %s639 = scalar_lea.vmem [#allocation8], %s638
        %p640 = pneg %p278
        %p641 = pneg %p275
        %p642 = scmp.lt.s32.totalorder %s42, 1
        %s643 = scalar_select %p642, %s42, 1
        %s644 = smul.addr %s643, 8
        %s645 = smul.addr %s644, 8
        %s646 = scalar_lea.vmem %s9, %s645
        %p647 = pneg %p304
        %p648 = pneg %p301
        %p649 = scmp.lt.s32.totalorder %s42, 1
        %s650 = scalar_select %p649, %s42, 1
        %s651 = scalar_lea.vmem %s10, %s650
        %p652 = pneg %p330
        %p653 = pneg %p327
        %p654 = scmp.lt.s32.totalorder %s42, 1
        %s655 = scalar_select %p654, %s42, 1
        %s656 = scalar_lea.vmem %s11, %s655
        %p657 = pneg %p356
        %p658 = pneg %p353
        %p659 = pneg %p382
        %p660 = pneg %p379
        %s661 = sand.u32 %s369, 1
        %s662 = scalar_lea.sflag [#allocation5], %s661
        %s663 = sand.u32 %s369, 1
        %s664 = smul.addr %s663, 8
        %s665 = scalar_lea.vmem [#allocation9], %s664
        %p666 = pneg %p410
        %p667 = pneg %p407
        %s668 = sand.u32 %s397, 1
        %s669 = scalar_lea.sflag [#allocation11], %s668
        %s670 = sand.u32 %s397, 1
        %s671 = smul.addr %s670, 32
        %s672 = scalar_lea.vmem [#allocation10], %s671
        %p673 = scmp.lt.s32.totalorder %s41, 1
        %s674 = scalar_select %p673, %s41, 1
        %s675 = scalar_lea.vmem %s1, %s674
        %p676 = scmp.lt.s32.totalorder %s42, 1
        %s677 = scalar_select %p676, %s42, 1
        %s678 = smul.addr %s677, 4
        %s679 = smul.addr %s678, 8
        %s680 = scalar_lea.vmem %s2, %s679
        %p681 = scmp.lt.s32.totalorder %s42, 1
        %s682 = scalar_select %p681, %s42, 1
        %s683 = smul.addr %s682, 4
        %s684 = smul.addr %s683, 8
        %s685 = scalar_lea.vmem %s3, %s684
        %p686 = scmp.lt.s32.totalorder %s42, 1
        %s687 = scalar_select %p686, %s42, 1
        %s688 = smul.addr %s687, 4
        %s689 = smul.addr %s688, 8
        %s690 = scalar_lea.vmem %s4, %s689
        %p691 = scmp.lt.s32.totalorder %s42, 1
        %s692 = scalar_select %p691, %s42, 1
        %s693 = scalar_lea.vmem %s6, %s692
        %p694 = scmp.lt.s32.totalorder %s42, 1
        %s695 = scalar_select %p694, %s42, 1
        %s696 = scalar_lea.vmem %s7, %s695
        %p697 = scmp.lt.s32.totalorder %s42, 1
        %s698 = scalar_select %p697, %s42, 1
        %s699 = smul.addr %s698, 8
        %s700 = smul.addr %s699, 8
        %s701 = scalar_lea.vmem %s9, %s700
        %p702 = scmp.lt.s32.totalorder %s42, 1
        %s703 = scalar_select %p702, %s42, 1
        %s704 = scalar_lea.vmem %s10, %s703
        %p705 = scmp.lt.s32.totalorder %s42, 1
        %s706 = scalar_select %p705, %s42, 1
        %s707 = scalar_lea.vmem %s11, %s706
        %p708 = scmp.eq.s32.totalorder %s42, 0
        // Predicated region
        $region81: #{tpu_custom_call.1} parent=67 // pred_check
          %p709 = pneg %p708
        $region82: #{tpu_custom_call.1} parent=67 // pred_check_branch
          %711 = sbr.rel (%p709) target = $region84
        $region83: #{tpu_custom_call.1} parent=67 // pred_region
          %v712 = vld [vmem:[%s562] sm:$0xff]
          %vm713 = vcmask 261120
          %714 = vst.msk [vmem:[#allocation2] sm:$0xff] %vm713, %v712
        $region84: #{tpu_custom_call.1} parent=67 // pred_fallthru
          _
        %v715 = vld [vmem:[#allocation2] sm:$0xff]
        %v716 = vld [vmem:[%s675] sm:$0x1]
        %v717 = vld [vmem:[%s680] sm:$0xff]
        %v718 = vld [vmem:[%s680 + $0x8] sm:$0xff]
        %v719 = vld [vmem:[%s680 + $0x10] sm:$0xff]
        %v720 = vld [vmem:[%s680 + $0x18] sm:$0xff]
        %vm721 = vcmask 261120
        %v723 = vsel %vm721, %v715, 0
        %725 = vmatprep.subr.mxu0 0.0
        %726 = vmatpush1.msra.mxu0 %v717
        %727 = vmatprep.subr.mxu0 0.0
        %728 = vmatpush1.msra.mxu0 %v718
        %729 = vmatprep.subr.mxu0 0.0
        %730 = vmatpush1.msra.mxu0 %v719
        %731 = vmatprep.subr.mxu0 0.0
        %732 = vmatpush1.msra.mxu0 %v720
        %733 = vmatprep.subr.mxu0 0.0
        %734 = vmatpush1.msra.mxu0 0.0
        %735 = vmatprep.subr.mxu0 0.0
        %736 = vmatpush1.msra.mxu0 0.0
        %737 = vmatprep.subr.mxu0 0.0
        %738 = vmatpush1.msra.mxu0 0.0
        %739 = vmatprep.subr.mxu0 0.0
        %740 = vmatpush1.msra.mxu0 0.0
        %741 = vmatprep.subr.mxu0 0.0
        %742 = vmatpush1.msra.mxu0 0.0
        %743 = vmatprep.subr.mxu0 0.0
        %744 = vmatpush1.msra.mxu0 0.0
        %745 = vmatprep.subr.mxu0 0.0
        %746 = vmatpush1.msra.mxu0 0.0
        %747 = vmatprep.subr.mxu0 0.0
        %748 = vmatpush1.msra.mxu0 0.0
        %749 = vmatprep.subr.mxu0 0.0
        %750 = vmatpush1.msra.mxu0 0.0
        %751 = vmatprep.subr.mxu0 0.0
        %752 = vmatpush1.msra.mxu0 0.0
        %753 = vmatprep.subr.mxu0 0.0
        %754 = vmatpush1.msra.mxu0 0.0
        %755 = vmatprep.subr.mxu0 0.0
        %756 = vmatpush1.msra.mxu0 0.0
        %757 = vmatprep.subr.mxu0 0.0
        %758 = vmatpush1.msra.mxu0 0.0
        %759 = vmatprep.subr.mxu0 0.0
        %760 = vmatpush1.msra.mxu0 0.0
        %761 = vmatprep.subr.mxu0 0.0
        %762 = vmatpush1.msra.mxu0 0.0
        %763 = vmatprep.subr.mxu0 0.0
        %764 = vmatpush1.msra.mxu0 0.0
        %765 = vmatprep.subr.mxu0 0.0
        %766 = vmatpush1.msra.mxu0 0.0
        %767 = vmatprep.subr.mxu0 0.0
        %768 = vmatpush1.msra.mxu0 0.0
        %769 = vmatprep.subr.mxu0 0.0
        %770 = vmatpush1.msra.mxu0 0.0
        %771 = vmatprep.subr.mxu0 0.0
        %772 = vmatpush1.msra.mxu0 0.0
        %773 = vmatprep.subr.mxu0 0.0
        %774 = vmatpush1.msra.mxu0 0.0
        %775 = vmatprep.subr.mxu0 0.0
        %776 = vmatpush1.msra.mxu0 0.0
        %777 = vmatprep.subr.mxu0 0.0
        %778 = vmatpush1.msra.mxu0 0.0
        %779 = vmatprep.subr.mxu0 0.0
        %780 = vmatpush1.msra.mxu0 0.0
        %781 = vmatprep.subr.mxu0 0.0
        %782 = vmatpush1.msra.mxu0 0.0
        %783 = vmatprep.subr.mxu0 0.0
        %784 = vmatpush1.msra.mxu0 0.0
        %785 = vmatprep.subr.mxu0 0.0
        %786 = vmatpush1.msra.mxu0 0.0
        %787 = vmatprep.subr.mxu0 0.0
        %788 = vmatpush1.msra.mxu0 0.0
        %789 = vmatprep.mubr.f32.mxu0 0.0
        %790 = vmatmul.mubr.f32.gmra.mrb[0].mxu0 %v723
        %v791 = vpop.f32.mrb[0].mxu0
        %v792 = vadd.f32 0.0, %v791
        %v793 = vpop.f32.mrb[0].mxu0
        %794 = vdwg.mxu0
        %v795 = vld [vmem:[%s685] sm:$0xff]
        %v796 = vld [vmem:[%s685 + $0x8] sm:$0xff]
        %v797 = vld [vmem:[%s685 + $0x10] sm:$0xff]
        %v798 = vld [vmem:[%s685 + $0x18] sm:$0xff]
        %799 = vmatprep.subr.mxu0 0.0
        %800 = vmatpush1.msra.mxu0 %v795
        %801 = vmatprep.subr.mxu0 0.0
        %802 = vmatpush1.msra.mxu0 %v796
        %803 = vmatprep.subr.mxu0 0.0
        %804 = vmatpush1.msra.mxu0 %v797
        %805 = vmatprep.subr.mxu0 0.0
        %806 = vmatpush1.msra.mxu0 %v798
        %807 = vmatprep.subr.mxu0 0.0
        %808 = vmatpush1.msra.mxu0 0.0
        %809 = vmatprep.subr.mxu0 0.0
        %810 = vmatpush1.msra.mxu0 0.0
        %811 = vmatprep.subr.mxu0 0.0
        %812 = vmatpush1.msra.mxu0 0.0
        %813 = vmatprep.subr.mxu0 0.0
        %814 = vmatpush1.msra.mxu0 0.0
        %815 = vmatprep.subr.mxu0 0.0
        %816 = vmatpush1.msra.mxu0 0.0
        %817 = vmatprep.subr.mxu0 0.0
        %818 = vmatpush1.msra.mxu0 0.0
        %819 = vmatprep.subr.mxu0 0.0
        %820 = vmatpush1.msra.mxu0 0.0
        %821 = vmatprep.subr.mxu0 0.0
        %822 = vmatpush1.msra.mxu0 0.0
        %823 = vmatprep.subr.mxu0 0.0
        %824 = vmatpush1.msra.mxu0 0.0
        %825 = vmatprep.subr.mxu0 0.0
        %826 = vmatpush1.msra.mxu0 0.0
        %827 = vmatprep.subr.mxu0 0.0
        %828 = vmatpush1.msra.mxu0 0.0
        %829 = vmatprep.subr.mxu0 0.0
        %830 = vmatpush1.msra.mxu0 0.0
        %831 = vmatprep.subr.mxu0 0.0
        %832 = vmatpush1.msra.mxu0 0.0
        %833 = vmatprep.subr.mxu0 0.0
        %834 = vmatpush1.msra.mxu0 0.0
        %835 = vmatprep.subr.mxu0 0.0
        %836 = vmatpush1.msra.mxu0 0.0
        %837 = vmatprep.subr.mxu0 0.0
        %838 = vmatpush1.msra.mxu0 0.0
        %839 = vmatprep.subr.mxu0 0.0
        %840 = vmatpush1.msra.mxu0 0.0
        %841 = vmatprep.subr.mxu0 0.0
        %842 = vmatpush1.msra.mxu0 0.0
        %843 = vmatprep.subr.mxu0 0.0
        %844 = vmatpush1.msra.mxu0 0.0
        %845 = vmatprep.subr.mxu0 0.0
        %846 = vmatpush1.msra.mxu0 0.0
        %847 = vmatprep.subr.mxu0 0.0
        %848 = vmatpush1.msra.mxu0 0.0
        %849 = vmatprep.subr.mxu0 0.0
        %850 = vmatpush1.msra.mxu0 0.0
        %851 = vmatprep.subr.mxu0 0.0
        %852 = vmatpush1.msra.mxu0 0.0
        %853 = vmatprep.subr.mxu0 0.0
        %854 = vmatpush1.msra.mxu0 0.0
        %855 = vmatprep.subr.mxu0 0.0
        %856 = vmatpush1.msra.mxu0 0.0
        %857 = vmatprep.subr.mxu0 0.0
        %858 = vmatpush1.msra.mxu0 0.0
        %859 = vmatprep.subr.mxu0 0.0
        %860 = vmatpush1.msra.mxu0 0.0
        %861 = vmatprep.subr.mxu0 0.0
        %862 = vmatpush1.msra.mxu0 0.0
        %863 = vmatprep.mubr.f32.mxu0 0.0
        %864 = vmatmul.mubr.f32.gmra.mrb[0].mxu0 %v723
        %v865 = vpop.f32.mrb[0].mxu0
        %v866 = vadd.f32 0.0, %v865
        %v867 = vpop.f32.mrb[0].mxu0
        %868 = vdwg.mxu0
        %v869 = vld [vmem:[%s690] sm:$0xff]
        %v870 = vld [vmem:[%s690 + $0x8] sm:$0xff]
        %v871 = vld [vmem:[%s690 + $0x10] sm:$0xff]
        %v872 = vld [vmem:[%s690 + $0x18] sm:$0xff]
        %873 = vmatprep.subr.mxu0 0.0
        %874 = vmatpush1.msra.mxu0 %v869
        %875 = vmatprep.subr.mxu0 0.0
        %876 = vmatpush1.msra.mxu0 %v870
        %877 = vmatprep.subr.mxu0 0.0
        %878 = vmatpush1.msra.mxu0 %v871
        %879 = vmatprep.subr.mxu0 0.0
        %880 = vmatpush1.msra.mxu0 %v872
        %881 = vmatprep.subr.mxu0 0.0
        %882 = vmatpush1.msra.mxu0 0.0
        %883 = vmatprep.subr.mxu0 0.0
        %884 = vmatpush1.msra.mxu0 0.0
        %885 = vmatprep.subr.mxu0 0.0
        %886 = vmatpush1.msra.mxu0 0.0
        %887 = vmatprep.subr.mxu0 0.0
        %888 = vmatpush1.msra.mxu0 0.0
        %889 = vmatprep.subr.mxu0 0.0
        %890 = vmatpush1.msra.mxu0 0.0
        %891 = vmatprep.subr.mxu0 0.0
        %892 = vmatpush1.msra.mxu0 0.0
        %893 = vmatprep.subr.mxu0 0.0
        %894 = vmatpush1.msra.mxu0 0.0
        %895 = vmatprep.subr.mxu0 0.0
        %896 = vmatpush1.msra.mxu0 0.0
        %897 = vmatprep.subr.mxu0 0.0
        %898 = vmatpush1.msra.mxu0 0.0
        %899 = vmatprep.subr.mxu0 0.0
        %900 = vmatpush1.msra.mxu0 0.0
        %901 = vmatprep.subr.mxu0 0.0
        %902 = vmatpush1.msra.mxu0 0.0
        %903 = vmatprep.subr.mxu0 0.0
        %904 = vmatpush1.msra.mxu0 0.0
        %905 = vmatprep.subr.mxu0 0.0
        %906 = vmatpush1.msra.mxu0 0.0
        %907 = vmatprep.subr.mxu0 0.0
        %908 = vmatpush1.msra.mxu0 0.0
        %909 = vmatprep.subr.mxu0 0.0
        %910 = vmatpush1.msra.mxu0 0.0
        %911 = vmatprep.subr.mxu0 0.0
        %912 = vmatpush1.msra.mxu0 0.0
        %913 = vmatprep.subr.mxu0 0.0
        %914 = vmatpush1.msra.mxu0 0.0
        %915 = vmatprep.subr.mxu0 0.0
        %916 = vmatpush1.msra.mxu0 0.0
        %917 = vmatprep.subr.mxu0 0.0
        %918 = vmatpush1.msra.mxu0 0.0
        %919 = vmatprep.subr.mxu0 0.0
        %920 = vmatpush1.msra.mxu0 0.0
        %921 = vmatprep.subr.mxu0 0.0
        %922 = vmatpush1.msra.mxu0 0.0
        %923 = vmatprep.subr.mxu0 0.0
        %924 = vmatpush1.msra.mxu0 0.0
        %925 = vmatprep.subr.mxu0 0.0
        %926 = vmatpush1.msra.mxu0 0.0
        %927 = vmatprep.subr.mxu0 0.0
        %928 = vmatpush1.msra.mxu0 0.0
        %929 = vmatprep.subr.mxu0 0.0
        %930 = vmatpush1.msra.mxu0 0.0
        %931 = vmatprep.subr.mxu0 0.0
        %932 = vmatpush1.msra.mxu0 0.0
        %933 = vmatprep.subr.mxu0 0.0
        %934 = vmatpush1.msra.mxu0 0.0
        %935 = vmatprep.subr.mxu0 0.0
        %936 = vmatpush1.msra.mxu0 0.0
        %937 = vmatprep.mubr.f32.mxu0 0.0
        %938 = vmatmul.mubr.f32.gmra.mrb[0].mxu0 %v723
        %v939 = vpop.f32.mrb[0].mxu0
        %v940 = vadd.f32 0.0, %v939
        %v941 = vpop.f32.mrb[0].mxu0
        %942 = vdwg.mxu0
        %v944 = vlaneseq
        %v945 = vshrl.u32 %v944, 7
        %v946 = vsub.s32 0, %v945
        %v947 = vrot.slane %v716, %v946
        %vm949 = vcmask 64512
        %v951 = vsel %vm949, %v792, 0
        %v954 = vsel %vm949, %v866, 0
        %956 = vmatprep.subr.mxu0 0.0
        %957 = vmatpush1.xpose.msra.mxu0 %v954
        %958 = vmatprep.subr.mxu0 0.0
        %959 = vmatpush1.xpose.msra.mxu0 0.0
        %960 = vmatprep.subr.mxu0 0.0
        %961 = vmatpush1.xpose.msra.mxu0 0.0
        %962 = vmatprep.subr.mxu0 0.0
        %963 = vmatpush1.xpose.msra.mxu0 0.0
        %964 = vmatprep.subr.mxu0 0.0
        %965 = vmatpush1.xpose.msra.mxu0 0.0
        %966 = vmatprep.subr.mxu0 0.0
        %967 = vmatpush1.xpose.msra.mxu0 0.0
        %968 = vmatprep.subr.mxu0 0.0
        %969 = vmatpush1.xpose.msra.mxu0 0.0
        %970 = vmatprep.subr.mxu0 0.0
        %971 = vmatpush1.xpose.msra.mxu0 0.0
        %972 = vmatprep.subr.mxu0 0.0
        %973 = vmatpush1.xpose.msra.mxu0 0.0
        %974 = vmatprep.subr.mxu0 0.0
        %975 = vmatpush1.xpose.msra.mxu0 0.0
        %976 = vmatprep.subr.mxu0 0.0
        %977 = vmatpush1.xpose.msra.mxu0 0.0
        %978 = vmatprep.subr.mxu0 0.0
        %979 = vmatpush1.xpose.msra.mxu0 0.0
        %980 = vmatprep.subr.mxu0 0.0
        %981 = vmatpush1.xpose.msra.mxu0 0.0
        %982 = vmatprep.subr.mxu0 0.0
        %983 = vmatpush1.xpose.msra.mxu0 0.0
        %984 = vmatprep.subr.mxu0 0.0
        %985 = vmatpush1.xpose.msra.mxu0 0.0
        %986 = vmatprep.subr.mxu0 0.0
        %987 = vmatpush1.xpose.msra.mxu0 0.0
        %988 = vmatprep.subr.mxu0 0.0
        %989 = vmatpush1.xpose.msra.mxu0 0.0
        %990 = vmatprep.subr.mxu0 0.0
        %991 = vmatpush1.xpose.msra.mxu0 0.0
        %992 = vmatprep.subr.mxu0 0.0
        %993 = vmatpush1.xpose.msra.mxu0 0.0
        %994 = vmatprep.subr.mxu0 0.0
        %995 = vmatpush1.xpose.msra.mxu0 0.0
        %996 = vmatprep.subr.mxu0 0.0
        %997 = vmatpush1.xpose.msra.mxu0 0.0
        %998 = vmatprep.subr.mxu0 0.0
        %999 = vmatpush1.xpose.msra.mxu0 0.0
        %1000 = vmatprep.subr.mxu0 0.0
        %1001 = vmatpush1.xpose.msra.mxu0 0.0
        %1002 = vmatprep.subr.mxu0 0.0
        %1003 = vmatpush1.xpose.msra.mxu0 0.0
        %1004 = vmatprep.subr.mxu0 0.0
        %1005 = vmatpush1.xpose.msra.mxu0 0.0
        %1006 = vmatprep.subr.mxu0 0.0
        %1007 = vmatpush1.xpose.msra.mxu0 0.0
        %1008 = vmatprep.subr.mxu0 0.0
        %1009 = vmatpush1.xpose.msra.mxu0 0.0
        %1010 = vmatprep.subr.mxu0 0.0
        %1011 = vmatpush1.xpose.msra.mxu0 0.0
        %1012 = vmatprep.subr.mxu0 0.0
        %1013 = vmatpush1.xpose.msra.mxu0 0.0
        %1014 = vmatprep.subr.mxu0 0.0
        %1015 = vmatpush1.xpose.msra.mxu0 0.0
        %1016 = vmatprep.subr.mxu0 0.0
        %1017 = vmatpush1.xpose.msra.mxu0 0.0
        %1018 = vmatprep.subr.mxu0 0.0
        %1019 = vmatpush1.xpose.msra.mxu0 0.0
        %1020 = vmatprep.mubr.f32.mxu0 0.0
        %1021 = vmatmul.mubr.f32.gmra.mrb[0].mxu0 %v951
        %v1022 = vpop.f32.mrb[0].mxu0
        %v1023 = vadd.f32 %v947, %v1022
        %v1024 = vpop.f32.mrb[0].mxu0
        %1025 = vdwg.mxu0
        %v1026 = vsel %vm949, %v1023, -inf
        %1027 = vmax.xlane.f32.xlu0 %v1026
        %v1028 = vpop.xlane.xlu0 %1027
        %v1029 = vsub.f32 %v1023, %v1028
        %v1030 = vmul.f32 %v1029, 1.442695
        %v1031 = vpow.pop %v1030
        %v1032 = vsel %vm949, %v1031, 0.0
        %1033 = vadd.xlane.f32.xlu0 %v1032
        %v1034 = vpop.xlane.xlu0 %1033
        %v1035 = vrcp.pop %v1034
        %v1036 = vmul.f32 1.0, %v1035
        %v1037 = vmul.f32 %v1031, %v1036
        %1038 = vst.msk [vmem:[%s672] sm:$0xff] %vm949, %v1037
        %v1040 = vsel %vm949, %v1037, 0
        %1042 = vmatprep.subr.mxu0 0.0
        %1043 = vmatpush1.msra.mxu0 %v940
        %1044 = vmatprep.subr.mxu0 0.0
        %1045 = vmatpush1.msra.mxu0 0.0
        %1046 = vmatprep.subr.mxu0 0.0
        %1047 = vmatpush1.msra.mxu0 0.0
        %1048 = vmatprep.subr.mxu0 0.0
        %1049 = vmatpush1.msra.mxu0 0.0
        %1050 = vmatprep.subr.mxu0 0.0
        %1051 = vmatpush1.msra.mxu0 0.0
        %1052 = vmatprep.subr.mxu0 0.0
        %1053 = vmatpush1.msra.mxu0 0.0
        %1054 = vmatprep.subr.mxu0 0.0
        %1055 = vmatpush1.msra.mxu0 0.0
        %1056 = vmatprep.subr.mxu0 0.0
        %1057 = vmatpush1.msra.mxu0 0.0
        %1058 = vmatprep.subr.mxu0 0.0
        %1059 = vmatpush1.msra.mxu0 0.0
        %1060 = vmatprep.subr.mxu0 0.0
        %1061 = vmatpush1.msra.mxu0 0.0
        %1062 = vmatprep.subr.mxu0 0.0
        %1063 = vmatpush1.msra.mxu0 0.0
        %1064 = vmatprep.subr.mxu0 0.0
        %1065 = vmatpush1.msra.mxu0 0.0
        %1066 = vmatprep.subr.mxu0 0.0
        %1067 = vmatpush1.msra.mxu0 0.0
        %1068 = vmatprep.subr.mxu0 0.0
        %1069 = vmatpush1.msra.mxu0 0.0
        %1070 = vmatprep.subr.mxu0 0.0
        %1071 = vmatpush1.msra.mxu0 0.0
        %1072 = vmatprep.subr.mxu0 0.0
        %1073 = vmatpush1.msra.mxu0 0.0
        %1074 = vmatprep.subr.mxu0 0.0
        %1075 = vmatpush1.msra.mxu0 0.0
        %1076 = vmatprep.subr.mxu0 0.0
        %1077 = vmatpush1.msra.mxu0 0.0
        %1078 = vmatprep.subr.mxu0 0.0
        %1079 = vmatpush1.msra.mxu0 0.0
        %1080 = vmatprep.subr.mxu0 0.0
        %1081 = vmatpush1.msra.mxu0 0.0
        %1082 = vmatprep.subr.mxu0 0.0
        %1083 = vmatpush1.msra.mxu0 0.0
        %1084 = vmatprep.subr.mxu0 0.0
        %1085 = vmatpush1.msra.mxu0 0.0
        %1086 = vmatprep.subr.mxu0 0.0
        %1087 = vmatpush1.msra.mxu0 0.0
        %1088 = vmatprep.subr.mxu0 0.0
        %1089 = vmatpush1.msra.mxu0 0.0
        %1090 = vmatprep.subr.mxu0 0.0
        %1091 = vmatpush1.msra.mxu0 0.0
        %1092 = vmatprep.subr.mxu0 0.0
        %1093 = vmatpush1.msra.mxu0 0.0
        %1094 = vmatprep.subr.mxu0 0.0
        %1095 = vmatpush1.msra.mxu0 0.0
        %1096 = vmatprep.subr.mxu0 0.0
        %1097 = vmatpush1.msra.mxu0 0.0
        %1098 = vmatprep.subr.mxu0 0.0
        %1099 = vmatpush1.msra.mxu0 0.0
        %1100 = vmatprep.subr.mxu0 0.0
        %1101 = vmatpush1.msra.mxu0 0.0
        %1102 = vmatprep.subr.mxu0 0.0
        %1103 = vmatpush1.msra.mxu0 0.0
        %1104 = vmatprep.subr.mxu0 0.0
        %1105 = vmatpush1.msra.mxu0 0.0
        %1106 = vmatprep.mubr.f32.mxu0 0.0
        %1107 = vmatmul.mubr.f32.gmra.mrb[0].mxu0 %v1040
        %v1108 = vpop.f32.mrb[0].mxu0
        %v1109 = vadd.f32 0.0, %v1108
        %v1110 = vpop.f32.mrb[0].mxu0
        %1111 = vdwg.mxu0
        %1112 = vrot.lane.b32.xlu0 %v792, 120
        %v1113 = vpop.permute.xlu0 %1112
        %1114 = vrot.lane.b32.xlu0 %v866, 120
        %v1115 = vpop.permute.xlu0 %1114
        %v1116 = vsel %vm949, %v1113, 0
        %v1118 = vsel %vm949, %v1115, 0
        %1120 = vmatprep.subr.mxu0 0.0
        %1121 = vmatpush1.xpose.msra.mxu0 %v1118
        %1122 = vmatprep.subr.mxu0 0.0
        %1123 = vmatpush1.xpose.msra.mxu0 0.0
        %1124 = vmatprep.subr.mxu0 0.0
        %1125 = vmatpush1.xpose.msra.mxu0 0.0
        %1126 = vmatprep.subr.mxu0 0.0
        %1127 = vmatpush1.xpose.msra.mxu0 0.0
        %1128 = vmatprep.subr.mxu0 0.0
        %1129 = vmatpush1.xpose.msra.mxu0 0.0
        %1130 = vmatprep.subr.mxu0 0.0
        %1131 = vmatpush1.xpose.msra.mxu0 0.0
        %1132 = vmatprep.subr.mxu0 0.0
        %1133 = vmatpush1.xpose.msra.mxu0 0.0
        %1134 = vmatprep.subr.mxu0 0.0
        %1135 = vmatpush1.xpose.msra.mxu0 0.0
        %1136 = vmatprep.subr.mxu0 0.0
        %1137 = vmatpush1.xpose.msra.mxu0 0.0
        %1138 = vmatprep.subr.mxu0 0.0
        %1139 = vmatpush1.xpose.msra.mxu0 0.0
        %1140 = vmatprep.subr.mxu0 0.0
        %1141 = vmatpush1.xpose.msra.mxu0 0.0
        %1142 = vmatprep.subr.mxu0 0.0
        %1143 = vmatpush1.xpose.msra.mxu0 0.0
        %1144 = vmatprep.subr.mxu0 0.0
        %1145 = vmatpush1.xpose.msra.mxu0 0.0
        %1146 = vmatprep.subr.mxu0 0.0
        %1147 = vmatpush1.xpose.msra.mxu0 0.0
        %1148 = vmatprep.subr.mxu0 0.0
        %1149 = vmatpush1.xpose.msra.mxu0 0.0
        %1150 = vmatprep.subr.mxu0 0.0
        %1151 = vmatpush1.xpose.msra.mxu0 0.0
        %1152 = vmatprep.subr.mxu0 0.0
        %1153 = vmatpush1.xpose.msra.mxu0 0.0
        %1154 = vmatprep.subr.mxu0 0.0
        %1155 = vmatpush1.xpose.msra.mxu0 0.0
        %1156 = vmatprep.subr.mxu0 0.0
        %1157 = vmatpush1.xpose.msra.mxu0 0.0
        %1158 = vmatprep.subr.mxu0 0.0
        %1159 = vmatpush1.xpose.msra.mxu0 0.0
        %1160 = vmatprep.subr.mxu0 0.0
        %1161 = vmatpush1.xpose.msra.mxu0 0.0
        %1162 = vmatprep.subr.mxu0 0.0
        %1163 = vmatpush1.xpose.msra.mxu0 0.0
        %1164 = vmatprep.subr.mxu0 0.0
        %1165 = vmatpush1.xpose.msra.mxu0 0.0
        %1166 = vmatprep.subr.mxu0 0.0
        %1167 = vmatpush1.xpose.msra.mxu0 0.0
        %1168 = vmatprep.subr.mxu0 0.0
        %1169 = vmatpush1.xpose.msra.mxu0 0.0
        %1170 = vmatprep.subr.mxu0 0.0
        %1171 = vmatpush1.xpose.msra.mxu0 0.0
        %1172 = vmatprep.subr.mxu0 0.0
        %1173 = vmatpush1.xpose.msra.mxu0 0.0
        %1174 = vmatprep.subr.mxu0 0.0
        %1175 = vmatpush1.xpose.msra.mxu0 0.0
        %1176 = vmatprep.subr.mxu0 0.0
        %1177 = vmatpush1.xpose.msra.mxu0 0.0
        %1178 = vmatprep.subr.mxu0 0.0
        %1179 = vmatpush1.xpose.msra.mxu0 0.0
        %1180 = vmatprep.subr.mxu0 0.0
        %1181 = vmatpush1.xpose.msra.mxu0 0.0
        %1182 = vmatprep.subr.mxu0 0.0
        %1183 = vmatpush1.xpose.msra.mxu0 0.0
        %1184 = vmatprep.mubr.f32.mxu0 0.0
        %1185 = vmatmul.mubr.f32.gmra.mrb[0].mxu0 %v1116
        %v1186 = vpop.f32.mrb[0].mxu0
        %v1187 = vadd.f32 %v947, %v1186
        %v1188 = vpop.f32.mrb[0].mxu0
        %1189 = vdwg.mxu0
        %v1190 = vsel %vm949, %v1187, -inf
        %1191 = vmax.xlane.f32.xlu0 %v1190
        %v1192 = vpop.xlane.xlu0 %1191
        %v1193 = vsub.f32 %v1187, %v1192
        %v1194 = vmul.f32 %v1193, 1.442695
        %v1195 = vpow.pop %v1194
        %v1196 = vsel %vm949, %v1195, 0.0
        %1197 = vadd.xlane.f32.xlu0 %v1196
        %v1198 = vpop.xlane.xlu0 %1197
        %v1199 = vrcp.pop %v1198
        %v1200 = vmul.f32 1.0, %v1199
        %v1201 = vmul.f32 %v1195, %v1200
        %s1202 = scalar_lea.vmem %s672, 8 [#allocation10]
        %1203 = vst.msk [vmem:[%s1202] sm:$0xff] %vm949, %v1201
        %1205 = vrot.lane.b32.xlu0 %v940, 120
        %v1206 = vpop.permute.xlu0 %1205
        %v1209 = vsel %vm949, %v1201, 0
        %1211 = vmatprep.subr.mxu0 0.0
        %1212 = vmatpush1.msra.mxu0 %v1206
        %1213 = vmatprep.subr.mxu0 0.0
        %1214 = vmatpush1.msra.mxu0 0.0
        %1215 = vmatprep.subr.mxu0 0.0
        %1216 = vmatpush1.msra.mxu0 0.0
        %1217 = vmatprep.subr.mxu0 0.0
        %1218 = vmatpush1.msra.mxu0 0.0
        %1219 = vmatprep.subr.mxu0 0.0
        %1220 = vmatpush1.msra.mxu0 0.0
        %1221 = vmatprep.subr.mxu0 0.0
        %1222 = vmatpush1.msra.mxu0 0.0
        %1223 = vmatprep.subr.mxu0 0.0
        %1224 = vmatpush1.msra.mxu0 0.0
        %1225 = vmatprep.subr.mxu0 0.0
        %1226 = vmatpush1.msra.mxu0 0.0
        %1227 = vmatprep.subr.mxu0 0.0
        %1228 = vmatpush1.msra.mxu0 0.0
        %1229 = vmatprep.subr.mxu0 0.0
        %1230 = vmatpush1.msra.mxu0 0.0
        %1231 = vmatprep.subr.mxu0 0.0
        %1232 = vmatpush1.msra.mxu0 0.0
        %1233 = vmatprep.subr.mxu0 0.0
        %1234 = vmatpush1.msra.mxu0 0.0
        %1235 = vmatprep.subr.mxu0 0.0
        %1236 = vmatpush1.msra.mxu0 0.0
        %1237 = vmatprep.subr.mxu0 0.0
        %1238 = vmatpush1.msra.mxu0 0.0
        %1239 = vmatprep.subr.mxu0 0.0
        %1240 = vmatpush1.msra.mxu0 0.0
        %1241 = vmatprep.subr.mxu0 0.0
        %1242 = vmatpush1.msra.mxu0 0.0
        %1243 = vmatprep.subr.mxu0 0.0
        %1244 = vmatpush1.msra.mxu0 0.0
        %1245 = vmatprep.subr.mxu0 0.0
        %1246 = vmatpush1.msra.mxu0 0.0
        %1247 = vmatprep.subr.mxu0 0.0
        %1248 = vmatpush1.msra.mxu0 0.0
        %1249 = vmatprep.subr.mxu0 0.0
        %1250 = vmatpush1.msra.mxu0 0.0
        %1251 = vmatprep.subr.mxu0 0.0
        %1252 = vmatpush1.msra.mxu0 0.0
        %1253 = vmatprep.subr.mxu0 0.0
        %1254 = vmatpush1.msra.mxu0 0.0
        %1255 = vmatprep.subr.mxu0 0.0
        %1256 = vmatpush1.msra.mxu0 0.0
        %1257 = vmatprep.subr.mxu0 0.0
        %1258 = vmatpush1.msra.mxu0 0.0
        %1259 = vmatprep.subr.mxu0 0.0
        %1260 = vmatpush1.msra.mxu0 0.0
        %1261 = vmatprep.subr.mxu0 0.0
        %1262 = vmatpush1.msra.mxu0 0.0
        %1263 = vmatprep.subr.mxu0 0.0
        %1264 = vmatpush1.msra.mxu0 0.0
        %1265 = vmatprep.subr.mxu0 0.0
        %1266 = vmatpush1.msra.mxu0 0.0
        %1267 = vmatprep.subr.mxu0 0.0
        %1268 = vmatpush1.msra.mxu0 0.0
        %1269 = vmatprep.subr.mxu0 0.0
        %1270 = vmatpush1.msra.mxu0 0.0
        %1271 = vmatprep.subr.mxu0 0.0
        %1272 = vmatpush1.msra.mxu0 0.0
        %1273 = vmatprep.subr.mxu0 0.0
        %1274 = vmatpush1.msra.mxu0 0.0
        %1275 = vmatprep.mubr.f32.mxu0 0.0
        %1276 = vmatmul.mubr.f32.gmra.mrb[0].mxu0 %v1209
        %v1277 = vpop.f32.mrb[0].mxu0
        %v1278 = vadd.f32 0.0, %v1277
        %v1279 = vpop.f32.mrb[0].mxu0
        %1280 = vdwg.mxu0
        %1281 = vrot.lane.b32.xlu0 %v792, 112
        %v1282 = vpop.permute.xlu0 %1281
        %1283 = vrot.lane.b32.xlu0 %v866, 112
        %v1284 = vpop.permute.xlu0 %1283
        %v1285 = vsel %vm949, %v1282, 0
        %v1287 = vsel %vm949, %v1284, 0
        %1289 = vmatprep.subr.mxu0 0.0
        %1290 = vmatpush1.xpose.msra.mxu0 %v1287
        %1291 = vmatprep.subr.mxu0 0.0
        %1292 = vmatpush1.xpose.msra.mxu0 0.0
        %1293 = vmatprep.subr.mxu0 0.0
        %1294 = vmatpush1.xpose.msra.mxu0 0.0
        %1295 = vmatprep.subr.mxu0 0.0
        %1296 = vmatpush1.xpose.msra.mxu0 0.0
        %1297 = vmatprep.subr.mxu0 0.0
        %1298 = vmatpush1.xpose.msra.mxu0 0.0
        %1299 = vmatprep.subr.mxu0 0.0
        %1300 = vmatpush1.xpose.msra.mxu0 0.0
        %1301 = vmatprep.subr.mxu0 0.0
        %1302 = vmatpush1.xpose.msra.mxu0 0.0
        %1303 = vmatprep.subr.mxu0 0.0
        %1304 = vmatpush1.xpose.msra.mxu0 0.0
        %1305 = vmatprep.subr.mxu0 0.0
        %1306 = vmatpush1.xpose.msra.mxu0 0.0
        %1307 = vmatprep.subr.mxu0 0.0
        %1308 = vmatpush1.xpose.msra.mxu0 0.0
        %1309 = vmatprep.subr.mxu0 0.0
        %1310 = vmatpush1.xpose.msra.mxu0 0.0
        %1311 = vmatprep.subr.mxu0 0.0
        %1312 = vmatpush1.xpose.msra.mxu0 0.0
        %1313 = vmatprep.subr.mxu0 0.0
        %1314 = vmatpush1.xpose.msra.mxu0 0.0
        %1315 = vmatprep.subr.mxu0 0.0
        %1316 = vmatpush1.xpose.msra.mxu0 0.0
        %1317 = vmatprep.subr.mxu0 0.0
        %1318 = vmatpush1.xpose.msra.mxu0 0.0
        %1319 = vmatprep.subr.mxu0 0.0
        %1320 = vmatpush1.xpose.msra.mxu0 0.0
        %1321 = vmatprep.subr.mxu0 0.0
        %1322 = vmatpush1.xpose.msra.mxu0 0.0
        %1323 = vmatprep.subr.mxu0 0.0
        %1324 = vmatpush1.xpose.msra.mxu0 0.0
        %1325 = vmatprep.subr.mxu0 0.0
        %1326 = vmatpush1.xpose.msra.mxu0 0.0
        %1327 = vmatprep.subr.mxu0 0.0
        %1328 = vmatpush1.xpose.msra.mxu0 0.0
        %1329 = vmatprep.subr.mxu0 0.0
        %1330 = vmatpush1.xpose.msra.mxu0 0.0
        %1331 = vmatprep.subr.mxu0 0.0
        %1332 = vmatpush1.xpose.msra.mxu0 0.0
        %1333 = vmatprep.subr.mxu0 0.0
        %1334 = vmatpush1.xpose.msra.mxu0 0.0
        %1335 = vmatprep.subr.mxu0 0.0
        %1336 = vmatpush1.xpose.msra.mxu0 0.0
        %1337 = vmatprep.subr.mxu0 0.0
        %1338 = vmatpush1.xpose.msra.mxu0 0.0
        %1339 = vmatprep.subr.mxu0 0.0
        %1340 = vmatpush1.xpose.msra.mxu0 0.0
        %1341 = vmatprep.subr.mxu0 0.0
        %1342 = vmatpush1.xpose.msra.mxu0 0.0
        %1343 = vmatprep.subr.mxu0 0.0
        %1344 = vmatpush1.xpose.msra.mxu0 0.0
        %1345 = vmatprep.subr.mxu0 0.0
        %1346 = vmatpush1.xpose.msra.mxu0 0.0
        %1347 = vmatprep.subr.mxu0 0.0
        %1348 = vmatpush1.xpose.msra.mxu0 0.0
        %1349 = vmatprep.subr.mxu0 0.0
        %1350 = vmatpush1.xpose.msra.mxu0 0.0
        %1351 = vmatprep.subr.mxu0 0.0
        %1352 = vmatpush1.xpose.msra.mxu0 0.0
        %1353 = vmatprep.mubr.f32.mxu0 0.0
        %1354 = vmatmul.mubr.f32.gmra.mrb[0].mxu0 %v1285
        %v1355 = vpop.f32.mrb[0].mxu0
        %v1356 = vadd.f32 %v947, %v1355
        %v1357 = vpop.f32.mrb[0].mxu0
        %1358 = vdwg.mxu0
        %v1359 = vsel %vm949, %v1356, -inf
        %1360 = vmax.xlane.f32.xlu0 %v1359
        %v1361 = vpop.xlane.xlu0 %1360
        %v1362 = vsub.f32 %v1356, %v1361
        %v1363 = vmul.f32 %v1362, 1.442695
        %v1364 = vpow.pop %v1363
        %v1365 = vsel %vm949, %v1364, 0.0
        %1366 = vadd.xlane.f32.xlu0 %v1365
        %v1367 = vpop.xlane.xlu0 %1366
        %v1368 = vrcp.pop %v1367
        %v1369 = vmul.f32 1.0, %v1368
        %v1370 = vmul.f32 %v1364, %v1369
        %s1371 = scalar_lea.vmem %s672, 16 [#allocation10]
        %1372 = vst.msk [vmem:[%s1371] sm:$0xff] %vm949, %v1370
        %1373 = vrot.lane.b32.xlu0 %v940, 112
        %v1374 = vpop.permute.xlu0 %1373
        %v1377 = vsel %vm949, %v1370, 0
        %1379 = vmatprep.subr.mxu0 0.0
        %1380 = vmatpush1.msra.mxu0 %v1374
        %1381 = vmatprep.subr.mxu0 0.0
        %1382 = vmatpush1.msra.mxu0 0.0
        %1383 = vmatprep.subr.mxu0 0.0
        %1384 = vmatpush1.msra.mxu0 0.0
        %1385 = vmatprep.subr.mxu0 0.0
        %1386 = vmatpush1.msra.mxu0 0.0
        %1387 = vmatprep.subr.mxu0 0.0
        %1388 = vmatpush1.msra.mxu0 0.0
        %1389 = vmatprep.subr.mxu0 0.0
        %1390 = vmatpush1.msra.mxu0 0.0
        %1391 = vmatprep.subr.mxu0 0.0
        %1392 = vmatpush1.msra.mxu0 0.0
        %1393 = vmatprep.subr.mxu0 0.0
        %1394 = vmatpush1.msra.mxu0 0.0
        %1395 = vmatprep.subr.mxu0 0.0
        %1396 = vmatpush1.msra.mxu0 0.0
        %1397 = vmatprep.subr.mxu0 0.0
        %1398 = vmatpush1.msra.mxu0 0.0
        %1399 = vmatprep.subr.mxu0 0.0
        %1400 = vmatpush1.msra.mxu0 0.0
        %1401 = vmatprep.subr.mxu0 0.0
        %1402 = vmatpush1.msra.mxu0 0.0
        %1403 = vmatprep.subr.mxu0 0.0
        %1404 = vmatpush1.msra.mxu0 0.0
        %1405 = vmatprep.subr.mxu0 0.0
        %1406 = vmatpush1.msra.mxu0 0.0
        %1407 = vmatprep.subr.mxu0 0.0
        %1408 = vmatpush1.msra.mxu0 0.0
        %1409 = vmatprep.subr.mxu0 0.0
        %1410 = vmatpush1.msra.mxu0 0.0
        %1411 = vmatprep.subr.mxu0 0.0
        %1412 = vmatpush1.msra.mxu0 0.0
        %1413 = vmatprep.subr.mxu0 0.0
        %1414 = vmatpush1.msra.mxu0 0.0
        %1415 = vmatprep.subr.mxu0 0.0
        %1416 = vmatpush1.msra.mxu0 0.0
        %1417 = vmatprep.subr.mxu0 0.0
        %1418 = vmatpush1.msra.mxu0 0.0
        %1419 = vmatprep.subr.mxu0 0.0
        %1420 = vmatpush1.msra.mxu0 0.0
        %1421 = vmatprep.subr.mxu0 0.0
        %1422 = vmatpush1.msra.mxu0 0.0
        %1423 = vmatprep.subr.mxu0 0.0
        %1424 = vmatpush1.msra.mxu0 0.0
        %1425 = vmatprep.subr.mxu0 0.0
        %1426 = vmatpush1.msra.mxu0 0.0
        %1427 = vmatprep.subr.mxu0 0.0
        %1428 = vmatpush1.msra.mxu0 0.0
        %1429 = vmatprep.subr.mxu0 0.0
        %1430 = vmatpush1.msra.mxu0 0.0
        %1431 = vmatprep.subr.mxu0 0.0
        %1432 = vmatpush1.msra.mxu0 0.0
        %1433 = vmatprep.subr.mxu0 0.0
        %1434 = vmatpush1.msra.mxu0 0.0
        %1435 = vmatprep.subr.mxu0 0.0
        %1436 = vmatpush1.msra.mxu0 0.0
        %1437 = vmatprep.subr.mxu0 0.0
        %1438 = vmatpush1.msra.mxu0 0.0
        %1439 = vmatprep.subr.mxu0 0.0
        %1440 = vmatpush1.msra.mxu0 0.0
        %1441 = vmatprep.subr.mxu0 0.0
        %1442 = vmatpush1.msra.mxu0 0.0
        %1443 = vmatprep.mubr.f32.mxu0 0.0
        %1444 = vmatmul.mubr.f32.gmra.mrb[0].mxu0 %v1377
        %v1445 = vpop.f32.mrb[0].mxu0
        %v1446 = vadd.f32 0.0, %v1445
        %v1447 = vpop.f32.mrb[0].mxu0
        %1448 = vdwg.mxu0
        %1449 = vrot.lane.b32.xlu0 %v792, 104
        %v1450 = vpop.permute.xlu0 %1449
        %1451 = vrot.lane.b32.xlu0 %v866, 104
        %v1452 = vpop.permute.xlu0 %1451
        %v1453 = vsel %vm949, %v1450, 0
        %v1455 = vsel %vm949, %v1452, 0
        %1457 = vmatprep.subr.mxu0 0.0
        %1458 = vmatpush1.xpose.msra.mxu0 %v1455
        %1459 = vmatprep.subr.mxu0 0.0
        %1460 = vmatpush1.xpose.msra.mxu0 0.0
        %1461 = vmatprep.subr.mxu0 0.0
        %1462 = vmatpush1.xpose.msra.mxu0 0.0
        %1463 = vmatprep.subr.mxu0 0.0
        %1464 = vmatpush1.xpose.msra.mxu0 0.0
        %1465 = vmatprep.subr.mxu0 0.0
        %1466 = vmatpush1.xpose.msra.mxu0 0.0
        %1467 = vmatprep.subr.mxu0 0.0
        %1468 = vmatpush1.xpose.msra.mxu0 0.0
        %1469 = vmatprep.subr.mxu0 0.0
        %1470 = vmatpush1.xpose.msra.mxu0 0.0
        %1471 = vmatprep.subr.mxu0 0.0
        %1472 = vmatpush1.xpose.msra.mxu0 0.0
        %1473 = vmatprep.subr.mxu0 0.0
        %1474 = vmatpush1.xpose.msra.mxu0 0.0
        %1475 = vmatprep.subr.mxu0 0.0
        %1476 = vmatpush1.xpose.msra.mxu0 0.0
        %1477 = vmatprep.subr.mxu0 0.0
        %1478 = vmatpush1.xpose.msra.mxu0 0.0
        %1479 = vmatprep.subr.mxu0 0.0
        %1480 = vmatpush1.xpose.msra.mxu0 0.0
        %1481 = vmatprep.subr.mxu0 0.0
        %1482 = vmatpush1.xpose.msra.mxu0 0.0
        %1483 = vmatprep.subr.mxu0 0.0
        %1484 = vmatpush1.xpose.msra.mxu0 0.0
        %1485 = vmatprep.subr.mxu0 0.0
        %1486 = vmatpush1.xpose.msra.mxu0 0.0
        %1487 = vmatprep.subr.mxu0 0.0
        %1488 = vmatpush1.xpose.msra.mxu0 0.0
        %1489 = vmatprep.subr.mxu0 0.0
        %1490 = vmatpush1.xpose.msra.mxu0 0.0
        %1491 = vmatprep.subr.mxu0 0.0
        %1492 = vmatpush1.xpose.msra.mxu0 0.0
        %1493 = vmatprep.subr.mxu0 0.0
        %1494 = vmatpush1.xpose.msra.mxu0 0.0
        %1495 = vmatprep.subr.mxu0 0.0
        %1496 = vmatpush1.xpose.msra.mxu0 0.0
        %1497 = vmatprep.subr.mxu0 0.0
        %1498 = vmatpush1.xpose.msra.mxu0 0.0
        %1499 = vmatprep.subr.mxu0 0.0
        %1500 = vmatpush1.xpose.msra.mxu0 0.0
        %1501 = vmatprep.subr.mxu0 0.0
        %1502 = vmatpush1.xpose.msra.mxu0 0.0
        %1503 = vmatprep.subr.mxu0 0.0
        %1504 = vmatpush1.xpose.msra.mxu0 0.0
        %1505 = vmatprep.subr.mxu0 0.0
        %1506 = vmatpush1.xpose.msra.mxu0 0.0
        %1507 = vmatprep.subr.mxu0 0.0
        %1508 = vmatpush1.xpose.msra.mxu0 0.0
        %1509 = vmatprep.subr.mxu0 0.0
        %1510 = vmatpush1.xpose.msra.mxu0 0.0
        %1511 = vmatprep.subr.mxu0 0.0
        %1512 = vmatpush1.xpose.msra.mxu0 0.0
        %1513 = vmatprep.subr.mxu0 0.0
        %1514 = vmatpush1.xpose.msra.mxu0 0.0
        %1515 = vmatprep.subr.mxu0 0.0
        %1516 = vmatpush1.xpose.msra.mxu0 0.0
        %1517 = vmatprep.subr.mxu0 0.0
        %1518 = vmatpush1.xpose.msra.mxu0 0.0
        %1519 = vmatprep.subr.mxu0 0.0
        %1520 = vmatpush1.xpose.msra.mxu0 0.0
        %1521 = vmatprep.mubr.f32.mxu0 0.0
        %1522 = vmatmul.mubr.f32.gmra.mrb[0].mxu0 %v1453
        %v1523 = vpop.f32.mrb[0].mxu0
        %v1524 = vadd.f32 %v947, %v1523
        %v1525 = vpop.f32.mrb[0].mxu0
        %1526 = vdwg.mxu0
        %v1527 = vsel %vm949, %v1524, -inf
        %1528 = vmax.xlane.f32.xlu0 %v1527
        %v1529 = vpop.xlane.xlu0 %1528
        %v1530 = vsub.f32 %v1524, %v1529
        %v1531 = vmul.f32 %v1530, 1.442695
        %v1532 = vpow.pop %v1531
        %v1533 = vsel %vm949, %v1532, 0.0
        %1534 = vadd.xlane.f32.xlu0 %v1533
        %v1535 = vpop.xlane.xlu0 %1534
        %v1536 = vrcp.pop %v1535
        %v1537 = vmul.f32 1.0, %v1536
        %v1538 = vmul.f32 %v1532, %v1537
        %s1539 = scalar_lea.vmem %s672, 24 [#allocation10]
        %1540 = vst.msk [vmem:[%s1539] sm:$0xff] %vm949, %v1538
        %1541 = vrot.lane.b32.xlu0 %v940, 104
        %v1542 = vpop.permute.xlu0 %1541
        %v1545 = vsel %vm949, %v1538, 0
        %1547 = vmatprep.subr.mxu0 0.0
        %1548 = vmatpush1.msra.mxu0 %v1542
        %1549 = vmatprep.subr.mxu0 0.0
        %1550 = vmatpush1.msra.mxu0 0.0
        %1551 = vmatprep.subr.mxu0 0.0
        %1552 = vmatpush1.msra.mxu0 0.0
        %1553 = vmatprep.subr.mxu0 0.0
        %1554 = vmatpush1.msra.mxu0 0.0
        %1555 = vmatprep.subr.mxu0 0.0
        %1556 = vmatpush1.msra.mxu0 0.0
        %1557 = vmatprep.subr.mxu0 0.0
        %1558 = vmatpush1.msra.mxu0 0.0
        %1559 = vmatprep.subr.mxu0 0.0
        %1560 = vmatpush1.msra.mxu0 0.0
        %1561 = vmatprep.subr.mxu0 0.0
        %1562 = vmatpush1.msra.mxu0 0.0
        %1563 = vmatprep.subr.mxu0 0.0
        %1564 = vmatpush1.msra.mxu0 0.0
        %1565 = vmatprep.subr.mxu0 0.0
        %1566 = vmatpush1.msra.mxu0 0.0
        %1567 = vmatprep.subr.mxu0 0.0
        %1568 = vmatpush1.msra.mxu0 0.0
        %1569 = vmatprep.subr.mxu0 0.0
        %1570 = vmatpush1.msra.mxu0 0.0
        %1571 = vmatprep.subr.mxu0 0.0
        %1572 = vmatpush1.msra.mxu0 0.0
        %1573 = vmatprep.subr.mxu0 0.0
        %1574 = vmatpush1.msra.mxu0 0.0
        %1575 = vmatprep.subr.mxu0 0.0
        %1576 = vmatpush1.msra.mxu0 0.0
        %1577 = vmatprep.subr.mxu0 0.0
        %1578 = vmatpush1.msra.mxu0 0.0
        %1579 = vmatprep.subr.mxu0 0.0
        %1580 = vmatpush1.msra.mxu0 0.0
        %1581 = vmatprep.subr.mxu0 0.0
        %1582 = vmatpush1.msra.mxu0 0.0
        %1583 = vmatprep.subr.mxu0 0.0
        %1584 = vmatpush1.msra.mxu0 0.0
        %1585 = vmatprep.subr.mxu0 0.0
        %1586 = vmatpush1.msra.mxu0 0.0
        %1587 = vmatprep.subr.mxu0 0.0
        %1588 = vmatpush1.msra.mxu0 0.0
        %1589 = vmatprep.subr.mxu0 0.0
        %1590 = vmatpush1.msra.mxu0 0.0
        %1591 = vmatprep.subr.mxu0 0.0
        %1592 = vmatpush1.msra.mxu0 0.0
        %1593 = vmatprep.subr.mxu0 0.0
        %1594 = vmatpush1.msra.mxu0 0.0
        %1595 = vmatprep.subr.mxu0 0.0
        %1596 = vmatpush1.msra.mxu0 0.0
        %1597 = vmatprep.subr.mxu0 0.0
        %1598 = vmatpush1.msra.mxu0 0.0
        %1599 = vmatprep.subr.mxu0 0.0
        %1600 = vmatpush1.msra.mxu0 0.0
        %1601 = vmatprep.subr.mxu0 0.0
        %1602 = vmatpush1.msra.mxu0 0.0
        %1603 = vmatprep.subr.mxu0 0.0
        %1604 = vmatpush1.msra.mxu0 0.0
        %1605 = vmatprep.subr.mxu0 0.0
        %1606 = vmatpush1.msra.mxu0 0.0
        %1607 = vmatprep.subr.mxu0 0.0
        %1608 = vmatpush1.msra.mxu0 0.0
        %1609 = vmatprep.subr.mxu0 0.0
        %1610 = vmatpush1.msra.mxu0 0.0
        %1611 = vmatprep.mubr.f32.mxu0 0.0
        %1612 = vmatmul.mubr.f32.gmra.mrb[0].mxu0 %v1545
        %v1613 = vpop.f32.mrb[0].mxu0
        %v1614 = vadd.f32 0.0, %v1613
        %v1615 = vpop.f32.mrb[0].mxu0
        %1616 = vdwg.mxu0
        %1618 = vrot.lane.b32.xlu0 %v1278, 8
        %v1619 = vpop.permute.xlu0 %1618
        %1622 = vrot.lane.b32.xlu0 %v1446, 16
        %v1623 = vpop.permute.xlu0 %1622
        %1626 = vrot.lane.b32.xlu0 %v1614, 24
        %v1627 = vpop.permute.xlu0 %1626
        %v1629 = vsel %vm949, %v1109, %v1619
        %vm1630 = vcmask 130048
        %v1631 = vsel %vm1630, %v1629, %v1623
        %vm1632 = vcmask 195584
        %v1633 = vsel %vm1632, %v1631, %v1627
        %v1634 = vld [vmem:[%s571] sm:$0xff]
        %v1635 = vld [vmem:[%s571 + $0x8] sm:$0xff]
        %v1636 = vld [vmem:[%s571 + $0x10] sm:$0xff]
        %v1637 = vld [vmem:[%s571 + $0x18] sm:$0xff]
        %v1639 = vsel %vm721, %v1633, 0
        %1641 = vmatprep.subr.mxu0 0.0
        %1642 = vmatpush1.msra.mxu0 %v1634
        %1643 = vmatprep.subr.mxu0 0.0
        %1644 = vmatpush1.msra.mxu0 %v1635
        %1645 = vmatprep.subr.mxu0 0.0
        %1646 = vmatpush1.msra.mxu0 %v1636
        %1647 = vmatprep.subr.mxu0 0.0
        %1648 = vmatpush1.msra.mxu0 %v1637
        %1649 = vmatprep.subr.mxu0 0.0
        %1650 = vmatpush1.msra.mxu0 0.0
        %1651 = vmatprep.subr.mxu0 0.0
        %1652 = vmatpush1.msra.mxu0 0.0
        %1653 = vmatprep.subr.mxu0 0.0
        %1654 = vmatpush1.msra.mxu0 0.0
        %1655 = vmatprep.subr.mxu0 0.0
        %1656 = vmatpush1.msra.mxu0 0.0
        %1657 = vmatprep.subr.mxu0 0.0
        %1658 = vmatpush1.msra.mxu0 0.0
        %1659 = vmatprep.subr.mxu0 0.0
        %1660 = vmatpush1.msra.mxu0 0.0
        %1661 = vmatprep.subr.mxu0 0.0
        %1662 = vmatpush1.msra.mxu0 0.0
        %1663 = vmatprep.subr.mxu0 0.0
        %1664 = vmatpush1.msra.mxu0 0.0
        %1665 = vmatprep.subr.mxu0 0.0
        %1666 = vmatpush1.msra.mxu0 0.0
        %1667 = vmatprep.subr.mxu0 0.0
        %1668 = vmatpush1.msra.mxu0 0.0
        %1669 = vmatprep.subr.mxu0 0.0
        %1670 = vmatpush1.msra.mxu0 0.0
        %1671 = vmatprep.subr.mxu0 0.0
        %1672 = vmatpush1.msra.mxu0 0.0
        %1673 = vmatprep.subr.mxu0 0.0
        %1674 = vmatpush1.msra.mxu0 0.0
        %1675 = vmatprep.subr.mxu0 0.0
        %1676 = vmatpush1.msra.mxu0 0.0
        %1677 = vmatprep.subr.mxu0 0.0
        %1678 = vmatpush1.msra.mxu0 0.0
        %1679 = vmatprep.subr.mxu0 0.0
        %1680 = vmatpush1.msra.mxu0 0.0
        %1681 = vmatprep.subr.mxu0 0.0
        %1682 = vmatpush1.msra.mxu0 0.0
        %1683 = vmatprep.subr.mxu0 0.0
        %1684 = vmatpush1.msra.mxu0 0.0
        %1685 = vmatprep.subr.mxu0 0.0
        %1686 = vmatpush1.msra.mxu0 0.0
        %1687 = vmatprep.subr.mxu0 0.0
        %1688 = vmatpush1.msra.mxu0 0.0
        %1689 = vmatprep.subr.mxu0 0.0
        %1690 = vmatpush1.msra.mxu0 0.0
        %1691 = vmatprep.subr.mxu0 0.0
        %1692 = vmatpush1.msra.mxu0 0.0
        %1693 = vmatprep.subr.mxu0 0.0
        %1694 = vmatpush1.msra.mxu0 0.0
        %1695 = vmatprep.subr.mxu0 0.0
        %1696 = vmatpush1.msra.mxu0 0.0
        %1697 = vmatprep.subr.mxu0 0.0
        %1698 = vmatpush1.msra.mxu0 0.0
        %1699 = vmatprep.subr.mxu0 0.0
        %1700 = vmatpush1.msra.mxu0 0.0
        %1701 = vmatprep.subr.mxu0 0.0
        %1702 = vmatpush1.msra.mxu0 0.0
        %1703 = vmatprep.subr.mxu0 0.0
        %1704 = vmatpush1.msra.mxu0 0.0
        %1705 = vmatprep.mubr.f32.mxu0 0.0
        %1706 = vmatmul.mubr.f32.gmra.mrb[0].mxu0 %v1639
        %v1707 = vpop.f32.mrb[0].mxu0
        %v1708 = vadd.f32 %v715, %v1707
        %v1709 = vpop.f32.mrb[0].mxu0
        %1710 = vdwg.mxu0
        %v1711 = vsel %vm721, %v1708, 0.0
        %1712 = vadd.xlane.f32.xlu0 %v1711
        %v1713 = vpop.xlane.xlu0 %1712
        %v1714 = vrcp.pop 32.0
        %v1715 = vmul.f32 %v1713, %v1714
        %v1716 = vsub.f32 %v1708, %v1715
        %v1717 = vmul.f32 %v1716, %v1716
        %v1718 = vsel %vm721, %v1717, 0.0
        %1719 = vadd.xlane.f32.xlu0 %v1718
        %v1720 = vpop.xlane.xlu0 %1719
        %v1721 = vmul.f32 %v1720, %v1714
        %v1722 = vadd.f32 %v1721, 1e-05
        %v1723 = vrsqrt.pop %v1722
        %v1724 = vmul.f32 %v1716, %v1723
        %v1725 = vld [vmem:[%s693] sm:$0x1]
        %v1727 = vlaneseq
        %v1728 = vshrl.u32 %v1727, 7
        %v1729 = vsub.s32 0, %v1728
        %v1730 = vrot.slane %v1725, %v1729
        %v1732 = vmul.f32 %v1724, %v1730
        %v1733 = vld [vmem:[%s696] sm:$0x1]
        %v1735 = vlaneseq
        %v1736 = vshrl.u32 %v1735, 7
        %v1737 = vsub.s32 0, %v1736
        %v1738 = vrot.slane %v1733, %v1737
        %v1740 = vadd.f32 %v1732, %v1738
        %v1741 = vld [vmem:[%s580] sm:$0xff]
        %v1742 = vld [vmem:[%s580 + $0x8] sm:$0xff]
        %v1743 = vld [vmem:[%s580 + $0x10] sm:$0xff]
        %v1744 = vld [vmem:[%s580 + $0x18] sm:$0xff]
        %v1746 = vsel %vm721, %v1740, 0
        %1748 = vmatprep.subr.mxu0 0.0
        %1749 = vmatpush1.msra.mxu0 %v1741
        %1750 = vmatprep.subr.mxu0 0.0
        %1751 = vmatpush1.msra.mxu0 %v1742
        %1752 = vmatprep.subr.mxu0 0.0
        %1753 = vmatpush1.msra.mxu0 %v1743
        %1754 = vmatprep.subr.mxu0 0.0
        %1755 = vmatpush1.msra.mxu0 %v1744
        %1756 = vmatprep.subr.mxu0 0.0
        %1757 = vmatpush1.msra.mxu0 0.0
        %1758 = vmatprep.subr.mxu0 0.0
        %1759 = vmatpush1.msra.mxu0 0.0
        %1760 = vmatprep.subr.mxu0 0.0
        %1761 = vmatpush1.msra.mxu0 0.0
        %1762 = vmatprep.subr.mxu0 0.0
        %1763 = vmatpush1.msra.mxu0 0.0
        %1764 = vmatprep.subr.mxu0 0.0
        %1765 = vmatpush1.msra.mxu0 0.0
        %1766 = vmatprep.subr.mxu0 0.0
        %1767 = vmatpush1.msra.mxu0 0.0
        %1768 = vmatprep.subr.mxu0 0.0
        %1769 = vmatpush1.msra.mxu0 0.0
        %1770 = vmatprep.subr.mxu0 0.0
        %1771 = vmatpush1.msra.mxu0 0.0
        %1772 = vmatprep.subr.mxu0 0.0
        %1773 = vmatpush1.msra.mxu0 0.0
        %1774 = vmatprep.subr.mxu0 0.0
        %1775 = vmatpush1.msra.mxu0 0.0
        %1776 = vmatprep.subr.mxu0 0.0
        %1777 = vmatpush1.msra.mxu0 0.0
        %1778 = vmatprep.subr.mxu0 0.0
        %1779 = vmatpush1.msra.mxu0 0.0
        %1780 = vmatprep.subr.mxu0 0.0
        %1781 = vmatpush1.msra.mxu0 0.0
        %1782 = vmatprep.subr.mxu0 0.0
        %1783 = vmatpush1.msra.mxu0 0.0
        %1784 = vmatprep.subr.mxu0 0.0
        %1785 = vmatpush1.msra.mxu0 0.0
        %1786 = vmatprep.subr.mxu0 0.0
        %1787 = vmatpush1.msra.mxu0 0.0
        %1788 = vmatprep.subr.mxu0 0.0
        %1789 = vmatpush1.msra.mxu0 0.0
        %1790 = vmatprep.subr.mxu0 0.0
        %1791 = vmatpush1.msra.mxu0 0.0
        %1792 = vmatprep.subr.mxu0 0.0
        %1793 = vmatpush1.msra.mxu0 0.0
        %1794 = vmatprep.subr.mxu0 0.0
        %1795 = vmatpush1.msra.mxu0 0.0
        %1796 = vmatprep.subr.mxu0 0.0
        %1797 = vmatpush1.msra.mxu0 0.0
        %1798 = vmatprep.subr.mxu0 0.0
        %1799 = vmatpush1.msra.mxu0 0.0
        %1800 = vmatprep.subr.mxu0 0.0
        %1801 = vmatpush1.msra.mxu0 0.0
        %1802 = vmatprep.subr.mxu0 0.0
        %1803 = vmatpush1.msra.mxu0 0.0
        %1804 = vmatprep.subr.mxu0 0.0
        %1805 = vmatpush1.msra.mxu0 0.0
        %1806 = vmatprep.subr.mxu0 0.0
        %1807 = vmatpush1.msra.mxu0 0.0
        %1808 = vmatprep.subr.mxu0 0.0
        %1809 = vmatpush1.msra.mxu0 0.0
        %1810 = vmatprep.subr.mxu0 0.0
        %1811 = vmatpush1.msra.mxu0 0.0
        %1812 = vmatprep.mubr.f32.mxu0 0.0
        %1813 = vmatmul.mubr.f32.gmra.mrb[0].mxu0 %v1746
        %v1814 = vpop.f32.mrb[0].mxu0
        %v1815 = vadd.f32 0.0, %v1814
        %v1816 = vpop.f32.mrb[0].mxu0
        %1817 = vdwg.mxu0
        %v1818 = vmax.f32 %v1815, 0.0
        %v1819 = vld [vmem:[%s701] sm:$0xff]
        %v1820 = vld [vmem:[%s701 + $0x8] sm:$0xff]
        %v1821 = vld [vmem:[%s701 + $0x10] sm:$0xff]
        %v1822 = vld [vmem:[%s701 + $0x18] sm:$0xff]
        %v1823 = vld [vmem:[%s701 + $0x20] sm:$0xff]
        %v1824 = vld [vmem:[%s701 + $0x28] sm:$0xff]
        %v1825 = vld [vmem:[%s701 + $0x30] sm:$0xff]
        %v1826 = vld [vmem:[%s701 + $0x38] sm:$0xff]
        %vm1827 = vcmask 523264
        %v1829 = vsel %vm1827, %v1818, 0
        %1831 = vmatprep.subr.mxu0 0.0
        %1832 = vmatpush1.msra.mxu0 %v1819
        %1833 = vmatprep.subr.mxu0 0.0
        %1834 = vmatpush1.msra.mxu0 %v1820
        %1835 = vmatprep.subr.mxu0 0.0
        %1836 = vmatpush1.msra.mxu0 %v1821
        %1837 = vmatprep.subr.mxu0 0.0
        %1838 = vmatpush1.msra.mxu0 %v1822
        %1839 = vmatprep.subr.mxu0 0.0
        %1840 = vmatpush1.msra.mxu0 %v1823
        %1841 = vmatprep.subr.mxu0 0.0
        %1842 = vmatpush1.msra.mxu0 %v1824
        %1843 = vmatprep.subr.mxu0 0.0
        %1844 = vmatpush1.msra.mxu0 %v1825
        %1845 = vmatprep.subr.mxu0 0.0
        %1846 = vmatpush1.msra.mxu0 %v1826
        %1847 = vmatprep.subr.mxu0 0.0
        %1848 = vmatpush1.msra.mxu0 0.0
        %1849 = vmatprep.subr.mxu0 0.0
        %1850 = vmatpush1.msra.mxu0 0.0
        %1851 = vmatprep.subr.mxu0 0.0
        %1852 = vmatpush1.msra.mxu0 0.0
        %1853 = vmatprep.subr.mxu0 0.0
        %1854 = vmatpush1.msra.mxu0 0.0
        %1855 = vmatprep.subr.mxu0 0.0
        %1856 = vmatpush1.msra.mxu0 0.0
        %1857 = vmatprep.subr.mxu0 0.0
        %1858 = vmatpush1.msra.mxu0 0.0
        %1859 = vmatprep.subr.mxu0 0.0
        %1860 = vmatpush1.msra.mxu0 0.0
        %1861 = vmatprep.subr.mxu0 0.0
        %1862 = vmatpush1.msra.mxu0 0.0
        %1863 = vmatprep.subr.mxu0 0.0
        %1864 = vmatpush1.msra.mxu0 0.0
        %1865 = vmatprep.subr.mxu0 0.0
        %1866 = vmatpush1.msra.mxu0 0.0
        %1867 = vmatprep.subr.mxu0 0.0
        %1868 = vmatpush1.msra.mxu0 0.0
        %1869 = vmatprep.subr.mxu0 0.0
        %1870 = vmatpush1.msra.mxu0 0.0
        %1871 = vmatprep.subr.mxu0 0.0
        %1872 = vmatpush1.msra.mxu0 0.0
        %1873 = vmatprep.subr.mxu0 0.0
        %1874 = vmatpush1.msra.mxu0 0.0
        %1875 = vmatprep.subr.mxu0 0.0
        %1876 = vmatpush1.msra.mxu0 0.0
        %1877 = vmatprep.subr.mxu0 0.0
        %1878 = vmatpush1.msra.mxu0 0.0
        %1879 = vmatprep.subr.mxu0 0.0
        %1880 = vmatpush1.msra.mxu0 0.0
        %1881 = vmatprep.subr.mxu0 0.0
        %1882 = vmatpush1.msra.mxu0 0.0
        %1883 = vmatprep.subr.mxu0 0.0
        %1884 = vmatpush1.msra.mxu0 0.0
        %1885 = vmatprep.subr.mxu0 0.0
        %1886 = vmatpush1.msra.mxu0 0.0
        %1887 = vmatprep.subr.mxu0 0.0
        %1888 = vmatpush1.msra.mxu0 0.0
        %1889 = vmatprep.subr.mxu0 0.0
        %1890 = vmatpush1.msra.mxu0 0.0
        %1891 = vmatprep.subr.mxu0 0.0
        %1892 = vmatpush1.msra.mxu0 0.0
        %1893 = vmatprep.subr.mxu0 0.0
        %1894 = vmatpush1.msra.mxu0 0.0
        %1895 = vmatprep.mubr.f32.mxu0 0.0
        %1896 = vmatmul.mubr.f32.gmra.mrb[0].mxu0 %v1829
        %v1897 = vpop.f32.mrb[0].mxu0
        %v1898 = vadd.f32 %v1740, %v1897
        %v1899 = vpop.f32.mrb[0].mxu0
        %1900 = vdwg.mxu0
        %v1901 = vsel %vm721, %v1898, 0.0
        %1902 = vadd.xlane.f32.xlu0 %v1901
        %v1903 = vpop.xlane.xlu0 %1902
        %v1904 = vmul.f32 %v1903, %v1714
        %v1905 = vsub.f32 %v1898, %v1904
        %v1906 = vmul.f32 %v1905, %v1905
        %v1907 = vsel %vm721, %v1906, 0.0
        %1908 = vadd.xlane.f32.xlu0 %v1907
        %v1909 = vpop.xlane.xlu0 %1908
        %v1910 = vmul.f32 %v1909, %v1714
        %v1911 = vadd.f32 %v1910, 1e-05
        %v1912 = vrsqrt.pop %v1911
        %v1913 = vmul.f32 %v1905, %v1912
        %v1914 = vld [vmem:[%s704] sm:$0x1]
        %v1916 = vlaneseq
        %v1917 = vshrl.u32 %v1916, 7
        %v1918 = vsub.s32 0, %v1917
        %v1919 = vrot.slane %v1914, %v1918
        %v1921 = vmul.f32 %v1913, %v1919
        %v1922 = vld [vmem:[%s707] sm:$0x1]
        %v1924 = vlaneseq
        %v1925 = vshrl.u32 %v1924, 7
        %v1926 = vsub.s32 0, %v1925
        %v1927 = vrot.slane %v1922, %v1926
        %v1929 = vadd.f32 %v1921, %v1927
        %p1930 = scmp.ne.s32.totalorder %s42, 1
        // Predicated region
        $region85: #{tpu_custom_call.1} parent=67 // pred_check
          %p1931 = pneg %p1930
        $region86: #{tpu_custom_call.1} parent=67 // pred_check_branch
          %1933 = sbr.rel (%p1931) target = $region88
        $region87: #{tpu_custom_call.1} parent=67 // pred_region
          %1934 = vst.msk [vmem:[#allocation2] sm:$0xff] %vm721, %v1929
        $region88: #{tpu_custom_call.1} parent=67 // pred_fallthru
          _
        %p1935 = scmp.eq.s32.totalorder %s42, 1
        // Predicated region
        $region89: #{tpu_custom_call.1} parent=67 // pred_check
          %p1936 = pneg %p1935
        $region90: #{tpu_custom_call.1} parent=67 // pred_check_branch
          %1938 = sbr.rel (%p1936) target = $region92
        $region91: #{tpu_custom_call.1} parent=67 // pred_region
          %1939 = vst.msk [vmem:[%s665] sm:$0xff] %vm721, %v1929
        $region92: #{tpu_custom_call.1} parent=67 // pred_fallthru
          _
        %s1940 = sand.u32 %s369, 1
        %s1941 = scalar_lea.sflag [#allocation5], %s1940
        %s1942 = sand.u32 %s369, 1
        %s1943 = smul.addr %s1942, 8
        %s1944 = scalar_lea.vmem [#allocation9], %s1943
        %s1945 = sand.u32 %s397, 1
        %s1946 = scalar_lea.sflag [#allocation11], %s1945
        %s1947 = sand.u32 %s397, 1
        %s1948 = smul.addr %s1947, 32
        %s1949 = scalar_lea.vmem [#allocation10], %s1948
        // Predicated region
        $region93: #{tpu_custom_call.1} parent=67 // pred_check
          %p1950 = pneg %p379
        $region94: #{tpu_custom_call.1} parent=67 // pred_check_branch
          %1952 = sbr.rel (%p1950) target = $region96
        $region95: #{tpu_custom_call.1} parent=67 // pred_region
          %s1954 = ssub.s32 128, 128
          %1955 = vsyncadd %s1941, %s1954
          %s1956 = smul.addr %s41, 128
          %s1957 = scalar_lea.hbm %s12, %s1956
          %s1959 = sshll.u32 %s1944, 4
          %s1960 = int_to_ptr.vmem [resolvable:$true] %s1959
          %1962 = dma.vmem_to_hbm [thread:$0]  %s1960, 128, %s1957, %s1941
        $region96: #{tpu_custom_call.1} parent=67 // pred_fallthru
          _
        // Predicated region
        $region97: #{tpu_custom_call.1} parent=67 // pred_check
          %p1963 = pneg %p407
        $region98: #{tpu_custom_call.1} parent=67 // pred_check_branch
          %1965 = sbr.rel (%p1963) target = $region100
        $region99: #{tpu_custom_call.1} parent=67 // pred_region
          %s1967 = ssub.s32 512, 512
          %1968 = vsyncadd %s1946, %s1967
          %s1969 = smul.addr %s42, 8
          %s1970 = sadd.s32 %s41, %s1969
          %s1971 = smul.addr %s1970, 128
          %s1972 = scalar_lea.hbm %s13, %s1971
          %s1973 = sshll.u32 %s1949, 4
          %s1974 = int_to_ptr.vmem [resolvable:$true] %s1973
          %1979 = dma.vmem_to_hbm [thread:$0]  %s1974, 512, %s1972, %s1946, 128, 256, 8
        $region100: #{tpu_custom_call.1} parent=67 // pred_fallthru
          _
      $region68: #{tpu_custom_call.1} parent=5 // pred_fallthru
        _
      %p1980 = scmp.le.s32.totalorder 2, %s32
      // Predicated region
      $region101: #{tpu_custom_call.1} parent=5 // pred_check
        %p1981 = pneg %p1980
      $region102: #{tpu_custom_call.1} parent=5 // pred_check_branch
        %1983 = sbr.rel (%p1981) target = $region104
      $region103: #{tpu_custom_call.1} parent=5 // pred_region
        %s1984 = ssub.s32 %s32, 2
        // Predicated region
        $region105: #{tpu_custom_call.1} parent=103 // pred_check
          %p1985 = pneg %p385
        $region106: #{tpu_custom_call.1} parent=103 // pred_check_branch
          %1987 = sbr.rel (%p1985) target = $region108
        $region107: #{tpu_custom_call.1} parent=103 // pred_region
          %s1988 = sand.u32 %s370, 1
          %s1989 = scalar_lea.sflag [#allocation5], %s1988
          %s1990 = sand.u32 %s370, 1
          %s1991 = smul.addr %s1990, 8
          %s1992 = scalar_lea.vmem [#allocation9], %s1991
          %1993 = dma.done %s1989, 128
        $region108: #{tpu_custom_call.1} parent=103 // pred_fallthru
          _
        // Predicated region
        $region109: #{tpu_custom_call.1} parent=103 // pred_check
          %p1994 = pneg %p413
        $region110: #{tpu_custom_call.1} parent=103 // pred_check_branch
          %1996 = sbr.rel (%p1994) target = $region112
        $region111: #{tpu_custom_call.1} parent=103 // pred_region
          %s1997 = sand.u32 %s398, 1
          %s1998 = scalar_lea.sflag [#allocation11], %s1997
          %s1999 = sand.u32 %s398, 1
          %s2000 = smul.addr %s1999, 32
          %s2001 = scalar_lea.vmem [#allocation10], %s2000
          %2002 = dma.done %s1998, 512
        $region112: #{tpu_custom_call.1} parent=103 // pred_fallthru
          _
      $region104: #{tpu_custom_call.1} parent=5 // pred_fallthru
        _
    $region6: #{tpu_custom_call.1} parent=1 // loop_footer
      %s36 = sadd.s32 1, %s32
    $region7: #{tpu_custom_call.1} parent=1 // loop_footer_branch
      %31 = sbr.rel target = $region3
    $region8: #{tpu_custom_call.1} parent=1 // loop_exit
      _
    %2003 = vsyncpa [#allocation4], 1
    %s2004 = scalar_lea.sflag [#allocation4], 1
    %2005 = vsyncpa %s2004, 1
    %2006 = vsyncpa [#allocation7], 1
    %s2007 = scalar_lea.sflag [#allocation7], 1
    %2008 = vsyncpa %s2007, 1
    %2009 = vsyncpa [#allocation5], 1
    %s2010 = scalar_lea.sflag [#allocation5], 1
    %2011 = vsyncpa %s2010, 1
    %2012 = vsyncpa [#allocation11], 1
    %s2013 = scalar_lea.sflag [#allocation11], 1
    %2014 = vsyncpa %s2013, 1

</llo_original>
